<compile_context>
chip_gen: v5e
topology: v5e:2x2
jax: 0.10.0
libtpu: 0.0.40
codegen_flags: <defaults>
</compile_context>

<pallas_src>
import random

import jax
import jax.numpy as jnp
import numpy as np
from jax.experimental import pallas as pl
from jax.experimental.pallas import tpu as pltpu

EVENT_ADD = 0
EVENT_REM = 1
EVENT_SEL = 2

T_BLK = 8    # tweaks per grid tile (sublane-aligned)
ROWS = 8     # coefficient rows: 0 = good-reward, 1 = time-penalty, 2..7 = pad


class HP:
    LEARN_FROM_ALL_GOOD = True
    TIME_PENALTY_MIXING = 0.1
    # TODO(synk): the torch entropy branch is not executable as written
    # (torch.exp(lsm, dim=-1), torch.dot on 2-D); kept disabled, matching the
    # HP.ENTROPY_COEF == 0 path of the original module.
    ENTROPY_COEF = 0.0
    ENTROPY_NORMALIZED = False


def _round_up(x, m):
    return ((x + m - 1) // m) * m


# ----------------------------------------------------------------------------
# Pallas kernel
# ----------------------------------------------------------------------------
def learning_model_kernel(tweaks_ref, feats_ref, w1_ref, b1_ref, tmat_ref,
                          w2_ref, b2_ref, a_ref, pmask_ref, b_ref,
                          out_ref, e_ref, m_ref):
    # grid = (tweak tiles [parallel], SEL-step tiles [arbitrary / reduction])
    s = pl.program_id(1)

    # ---- once per tweak tile: clause-evaluator logits, A-term, exp(logits) ----
    @pl.when(s == 0)
    def _init():
        base = jnp.dot(feats_ref[...], w1_ref[...],
                       preferred_element_type=jnp.float32) + b1_ref[...]      # (C, H)
        twh = jnp.dot(tweaks_ref[...], tmat_ref[...],
                      preferred_element_type=jnp.float32)                     # (Tb, H)
        w2 = w2_ref[...]                                                      # (H, 1)
        b2 = b2_ref[...]                                                      # (1, 1)
        for t in range(T_BLK):                                                # static unroll
            h_t = jnp.maximum(base + twh[t:t + 1, :], 0.0)                    # (C, H)
            e_ref[:, t:t + 1] = (jnp.dot(h_t, w2,
                                         preferred_element_type=jnp.float32)
                                 + b2)                                        # (C, 1)
        logits = e_ref[...]                                                   # (C, Tb)
        # per-clause coefficient terms (good row + time row) in one small matmul
        out_ref[...] = jnp.dot(a_ref[...], logits,
                               preferred_element_type=jnp.float32)            # (8, Tb)
        # one global shift for the factored log-sum-exp (no per-step max needed)
        m = jnp.max(jnp.max(logits, axis=0, keepdims=True), axis=1, keepdims=True)
        m_ref[...] = m
        e_ref[...] = jnp.exp(logits - m)                                      # (C, Tb)

    # ---- every SEL-step tile: softmax denominators + loss accumulation ----
    pmask = pmask_ref[...].astype(jnp.float32)                                # (S_blk, C)
    denom = jnp.dot(pmask, e_ref[...],
                    preferred_element_type=jnp.float32)                       # (S_blk, Tb)
    # clamp guards all-zero pad steps (their B coefficients are 0 anyway)
    lse = jnp.log(jnp.maximum(denom, 1e-30)) + m_ref[...]                     # (S_blk, Tb)
    out_ref[...] = out_ref[...] + jnp.dot(b_ref[...], lse,
                                          preferred_element_type=jnp.float32)  # (8, Tb)


# ----------------------------------------------------------------------------
# Host-side glue: replay the journal (pure Python control flow, as in torch)
# and fold it into the passive mask + per-clause / per-step coefficients.
# ----------------------------------------------------------------------------
def build_step_tensors(clauses, journal, proof_flas):
    ids_sorted = sorted(clauses.keys())
    id2idx = {cid: i for i, cid in enumerate(ids_sorted)}
    C = len(ids_sorted)
    feats = np.stack([np.asarray(clauses[cid], dtype=np.float32) for cid in ids_sorted])

    passive = set()
    a_good = np.zeros(C, np.float64)
    a_time = np.zeros(C, np.float64)
    pmask_rows, b_good, b_time = [], [], []
    num_good_steps = 0
    time_volume = 0.0

    for event in journal:
        tag, rid = event[0], event[1]
        if tag == EVENT_ADD:
            passive.add(rid)
        elif tag == EVENT_REM:
            passive.remove(rid)
        else:
            assert tag == EVENT_SEL
            event_time = event[2]
            if len(passive) < 2:
                continue
            plist = sorted(passive)
            pm = np.zeros(C, np.float32)
            for cid in plist:
                pm[id2idx[cid]] = 1.0
            bg = 0.0
            if HP.LEARN_FROM_ALL_GOOD:
                good = [cid for cid in plist if cid in proof_flas]
                if good:
                    inv = 1.0 / len(good)
                    for cid in good:
                        a_good[id2idx[cid]] -= inv
                    bg = 1.0
                    num_good_steps += 1
            elif rid in proof_flas:
                a_good[id2idx[rid]] -= 1.0
                bg = 1.0
                num_good_steps += 1
            bt = 0.0
            if HP.TIME_PENALTY_MIXING > 0.0:
                a_time[id2idx[rid]] += HP.TIME_PENALTY_MIXING * event_time
                bt = -HP.TIME_PENALTY_MIXING * event_time
                time_volume += event_time
            pmask_rows.append(pm)
            b_good.append(bg)
            b_time.append(bt)
            passive.remove(rid)

    S = len(pmask_rows)
    assert S > 0, "degenerate training example"
    pmaskT = np.stack(pmask_rows, axis=0)                       # (S, C)
    return (feats, a_good.astype(np.float32), a_time.astype(np.float32),
            pmaskT, np.asarray(b_good, np.float32), np.asarray(b_time, np.float32),
            num_good_steps, time_volume)


def learning_model_loss(params, clauses, journal, proof_flas, tweaks_to_try):
    (feats, a_good, a_time, pmaskT, b_good, b_time,
     num_good_steps, time_volume) = build_step_tensors(clauses, journal, proof_flas)

    C, F = feats.shape
    S = pmaskT.shape[0]
    tweaks = np.asarray(tweaks_to_try, np.float32)
    T, K = tweaks.shape
    H = int(np.asarray(params["w1"]).shape[1])

    # --- padding so all hot tiles are (8,128)-aligned and lane-dense ---
    C_pad = _round_up(C, 128)          # clauses ride the lane axis of pmaskT / A
    T_pad = _round_up(T, T_BLK)
    T_tiles = T_pad // T_BLK

    # S tile: multiple of 128; shrink so double-buffered pmask tiles stay small
    # (well under v7x's 64 MiB physical / v5e's 16 MiB scoped-default VMEM).
    S_blk = min(512, _round_up(S, 128))
    while S_blk > 128 and 2 * S_blk * C_pad * 2 > (8 << 20):
        S_blk -= 128
    S_pad = _round_up(S, S_blk)
    S_tiles = S_pad // S_blk

    feats_p = np.zeros((C_pad, F), np.float32); feats_p[:C] = feats
    tweaks_p = np.zeros((T_pad, K), np.float32); tweaks_p[:T] = tweaks
    a_mat = np.zeros((ROWS, C_pad), np.float32)
    a_mat[0, :C] = a_good
    a_mat[1, :C] = a_time
    b_mat = np.zeros((ROWS, S_pad), np.float32)
    b_mat[0, :S] = b_good
    b_mat[1, :S] = b_time
    pmask_p = np.zeros((S_pad, C_pad), np.float32); pmask_p[:S, :C] = pmaskT

    args = (jnp.asarray(tweaks_p),
            jnp.asarray(feats_p),
            jnp.asarray(params["w1"], jnp.float32),
            jnp.asarray(params["b1"], jnp.float32),
            jnp.asarray(params["tmat"], jnp.float32),
            jnp.asarray(params["w2"], jnp.float32),
            jnp.asarray(params["b2"], jnp.float32),
            jnp.asarray(a_mat),
            jnp.asarray(pmask_p, jnp.bfloat16),   # 0/1 exact in bf16, half the bytes
            jnp.asarray(b_mat))

    in_specs = [
        pl.BlockSpec((T_BLK, K), lambda t, s: (t, 0)),        # tweaks
        pl.BlockSpec((C_pad, F), lambda t, s: (0, 0)),        # clause features
        pl.BlockSpec((F, H), lambda t, s: (0, 0)),            # w1
        pl.BlockSpec((1, H), lambda t, s: (0, 0)),            # b1
        pl.BlockSpec((K, H), lambda t, s: (0, 0)),            # tmat
        pl.BlockSpec((H, 1), lambda t, s: (0, 0)),            # w2
        pl.BlockSpec((1, 1), lambda t, s: (0, 0)),            # b2
        pl.BlockSpec((ROWS, C_pad), lambda t, s: (0, 0)),     # per-clause coeffs A
        pl.BlockSpec((S_blk, C_pad), lambda t, s: (s, 0)),    # passive mask (bf16, streamed)
        pl.BlockSpec((ROWS, S_blk), lambda t, s: (0, s)),     # per-step coeffs B (streamed)
    ]

    # explicit VMEM budget: double-buffered streams + scratch + params + headroom
    resident = (2 * (S_blk * C_pad * 2 + ROWS * S_blk * 4)
                + C_pad * T_BLK * 4 + 4 * S_blk * T_BLK * 4
                + (C_pad * F + F * H + K * H + H + ROWS * C_pad + T_BLK * K) * 4)
    vmem_limit = int(min(48 << 20, max(16 << 20, 4 * resident)))

    out = pl.pallas_call(
        learning_model_kernel,
        out_shape=jax.ShapeDtypeStruct((T_tiles * ROWS, T_BLK), jnp.float32),
        grid_spec=pltpu.PrefetchScalarGridSpec(
            num_scalar_prefetch=0,
            grid=(T_tiles, S_tiles),
            in_specs=in_specs,
            out_specs=pl.BlockSpec((ROWS, T_BLK), lambda t, s: (t, 0)),
            scratch_shapes=[pltpu.VMEM((C_pad, T_BLK), jnp.float32),   # exp(logits - m)
                            pltpu.VMEM((1, 1), jnp.float32)]),         # global shift m
        compiler_params=pltpu.CompilerParams(
            dimension_semantics=("parallel", "arbitrary"),
            vmem_limit_bytes=vmem_limit),
    )(*args)

    out = np.asarray(jax.block_until_ready(out)).reshape(T_tiles, ROWS, T_BLK)
    good_tot = out[:, 0, :].reshape(-1)[:T]
    time_tot = out[:, 1, :].reshape(-1)[:T]

    loss = np.zeros(T, np.float32)
    something = False
    if num_good_steps > 0:
        something = True
        loss = loss + good_tot / num_good_steps
    if time_volume > 0:
        something = True
        loss = loss + time_tot / time_volume
    assert something, "The training example was still degenerate!"
    return jnp.asarray(loss)


# ----------------------------------------------------------------------------
# Pure-NumPy reference that literally mirrors the torch forward pass.
# ----------------------------------------------------------------------------
def reference_loss(params, clauses, journal, proof_flas, tweaks_to_try):
    w1 = np.asarray(params["w1"]); b1 = np.asarray(params["b1"])
    tmat = np.asarray(params["tmat"]); w2 = np.asarray(params["w2"])
    b2 = np.asarray(params["b2"])
    ids_sorted = sorted(clauses)
    id2idx = {cid: i for i, cid in enumerate(ids_sorted)}
    feats = np.stack([np.asarray(clauses[cid], np.float32) for cid in ids_sorted])
    logits_list = []
    for tw in np.asarray(tweaks_to_try, np.float32):
        h = np.maximum(feats @ w1 + b1 + tw[None, :] @ tmat, 0.0)
        logits_list.append((h @ w2)[:, 0] + b2[0, 0])
    logits = np.stack(logits_list)                            # (T, C)
    T = logits.shape[0]

    good_loss = np.zeros(T, np.float32); n_good_steps = 0
    time_loss = np.zeros(T, np.float32); time_volume = 0.0
    passive = set()
    for event in journal:
        tag, rid = event[0], event[1]
        if tag == EVENT_ADD:
            passive.add(rid)
        elif tag == EVENT_REM:
            passive.remove(rid)
        else:
            event_time = event[2]
            if len(passive) < 2:
                continue
            plist = sorted(passive)
            idxs = [id2idx[c] for c in plist]
            sub = logits[:, idxs]
            mx = sub.max(-1, keepdims=True)
            lsm = sub - (np.log(np.sum(np.exp(sub - mx), -1, keepdims=True)) + mx)
            if HP.LEARN_FROM_ALL_GOOD:
                good_idxs = [i for i, c in enumerate(plist) if c in proof_flas]
                if good_idxs:
                    good_loss += -np.sum(lsm[:, good_idxs], -1) / len(good_idxs)
                    n_good_steps += 1
            elif rid in proof_flas:
                good_loss += -lsm[:, plist.index(rid)]
                n_good_steps += 1
            if HP.TIME_PENALTY_MIXING > 0.0:
                time_loss += HP.TIME_PENALTY_MIXING * event_time * lsm[:, plist.index(rid)]
                time_volume += event_time
            passive.remove(rid)
    loss = np.zeros(T, np.float32)
    for l, n in [(good_loss, n_good_steps), (time_loss, time_volume)]:
        if n > 0:
            loss += l / n
    return loss


if __name__ == "__main__":
    C, F, H, K, T = 32, 8, 32, 4, 2

    key = jax.random.PRNGKey(0)
    k_feat, k_w1, k_b1, k_tm, k_w2, k_tw = jax.random.split(key, 6)

    feats_all = jax.random.normal(k_feat, (C, F), jnp.float32)
    params = {
        "w1": 0.3 * jax.random.normal(k_w1, (F, H), jnp.float32),
        "b1": 0.1 * jax.random.normal(k_b1, (1, H), jnp.float32),
        "tmat": 0.3 * jax.random.normal(k_tm, (K, H), jnp.float32),
        "w2": 0.3 * jax.random.normal(k_w2, (H, 1), jnp.float32),
        "b2": jnp.zeros((1, 1), jnp.float32),
    }
    tweaks_to_try = 0.5 * jax.random.normal(k_tw, (T, K), jnp.float32)

    # deterministic clauses / proof set / journal
    ids = [3 + 2 * i for i in range(C)]
    clauses = {cid: np.asarray(feats_all[i]) for i, cid in enumerate(ids)}
    rng = random.Random(0)
    proof_flas = set(rng.sample(ids, 8))

    journal = []
    passive_sim = set()
    t_now = 0.0
    for i, cid in enumerate(ids):
        journal.append((EVENT_ADD, cid))
        passive_sim.add(cid)
        if i == 10:
            rem_id = sorted(passive_sim)[0]
            journal.append((EVENT_REM, rem_id))
            passive_sim.remove(rem_id)
        if i % 4 == 3 and len(passive_sim) >= 2:
            sel = rng.choice(sorted(passive_sim))
            t_now += 0.5
            journal.append((EVENT_SEL, sel, t_now))
            passive_sim.remove(sel)
    extra = 0
    while len(passive_sim) >= 2 and extra < 6:
        sel = rng.choice(sorted(passive_sim))
        t_now += 0.5
        journal.append((EVENT_SEL, sel, t_now))
        passive_sim.remove(sel)
        extra += 1

    loss = learning_model_loss(params, clauses, journal, proof_flas, tweaks_to_try)
    loss = jax.block_until_ready(loss)

    ref = reference_loss(params, clauses, journal, proof_flas, np.asarray(tweaks_to_try))
    np.testing.assert_allclose(np.asarray(loss), ref, rtol=2e-3, atol=2e-3)
    print("KERNEL_OK")
</pallas_src>

<mosaic_0001>
module attributes {stable_mosaic.version = 11 : i64} {
  func.func @learning_model_kernel(%arg0: i32, %arg1: i32, %arg2: memref<8x4xf32, #tpu.memory_space<vmem>>, %arg3: memref<128x8xf32, #tpu.memory_space<vmem>>, %arg4: memref<8x32xf32, #tpu.memory_space<vmem>>, %arg5: memref<1x32xf32, #tpu.memory_space<vmem>>, %arg6: memref<4x32xf32, #tpu.memory_space<vmem>>, %arg7: memref<32x1xf32, #tpu.memory_space<vmem>>, %arg8: memref<1x1xf32, #tpu.memory_space<vmem>>, %arg9: memref<8x128xf32, #tpu.memory_space<vmem>>, %arg10: memref<128x128xbf16, #tpu.memory_space<vmem>>, %arg11: memref<8x128xf32, #tpu.memory_space<vmem>>, %arg12: memref<8x8xf32, #tpu.memory_space<vmem>>, %arg13: memref<128x8xf32, #tpu.memory_space<vmem>>, %arg14: memref<1x1xf32, #tpu.memory_space<vmem>>) attributes {dimension_semantics = [#tpu.dimension_semantics<parallel>, #tpu.dimension_semantics<arbitrary>], iteration_bounds = array<i64: 1, 1>, scalar_prefetch = 0 : i64, scratch_operands = 2 : i64, tpu.core_type = #tpu.core_type<tc>, window_params = [{transform_indices = @transform_0, window_bounds = array<i64: 8, 4>}, {pipeline_mode = #tpu.pipeline_mode<synchronous>, transform_indices = @transform_1, window_bounds = array<i64: 128, 8>}, {pipeline_mode = #tpu.pipeline_mode<synchronous>, transform_indices = @transform_2, window_bounds = array<i64: 8, 32>}, {pipeline_mode = #tpu.pipeline_mode<synchronous>, transform_indices = @transform_3, window_bounds = array<i64: 1, 32>}, {pipeline_mode = #tpu.pipeline_mode<synchronous>, transform_indices = @transform_4, window_bounds = array<i64: 4, 32>}, {pipeline_mode = #tpu.pipeline_mode<synchronous>, transform_indices = @transform_5, window_bounds = array<i64: 32, 1>}, {pipeline_mode = #tpu.pipeline_mode<synchronous>, transform_indices = @transform_6, window_bounds = array<i64: 1, 1>}, {pipeline_mode = #tpu.pipeline_mode<synchronous>, transform_indices = @transform_7, window_bounds = array<i64: 8, 128>}, {transform_indices = @transform_8, window_bounds = array<i64: 128, 128>}, {transform_indices = @transform_9, window_bounds = array<i64: 8, 128>}, {transform_indices = @transform_10, window_bounds = array<i64: 8, 8>}]} {
    %c0_i32 = arith.constant 0 : i32
    %0 = arith.cmpi eq, %arg1, %c0_i32 : i32
    %1 = arith.extui %0 : i1 to i32
    %c0_i32_0 = arith.constant 0 : i32
    %2 = arith.cmpi ne, %1, %c0_i32_0 : i32
    scf.if %2 {
      %c0_14 = arith.constant 0 : index
      %c0_15 = arith.constant 0 : index
      %18 = vector.load %arg3[%c0_14, %c0_15] : memref<128x8xf32, #tpu.memory_space<vmem>>, vector<128x8xf32>
      %c0_16 = arith.constant 0 : index
      %c0_17 = arith.constant 0 : index
      %19 = vector.load %arg4[%c0_16, %c0_17] : memref<8x32xf32, #tpu.memory_space<vmem>>, vector<8x32xf32>
      %cst_18 = arith.constant dense<0.000000e+00> : vector<128x32xf32>
      %20 = tpu.matmul %18, %19, %cst_18 {dimension_numbers = #tpu.dot_dimension_numbers<[1], [0], [0], [1], [0, 0, 1, 1], [], []>} : vector<128x8xf32>, vector<8x32xf32>, vector<128x32xf32> -> vector<128x32xf32>
      %c0_19 = arith.constant 0 : index
      %c0_20 = arith.constant 0 : index
      %21 = vector.load %arg5[%c0_19, %c0_20] : memref<1x32xf32, #tpu.memory_space<vmem>>, vector<1x32xf32>
      %22 = vector.broadcast %21 : vector<1x32xf32> to vector<128x32xf32>
      %23 = arith.addf %20, %22 : vector<128x32xf32>
      %c0_21 = arith.constant 0 : index
      %c0_22 = arith.constant 0 : index
      %24 = vector.load %arg2[%c0_21, %c0_22] : memref<8x4xf32, #tpu.memory_space<vmem>>, vector<8x4xf32>
      %c0_23 = arith.constant 0 : index
      %c0_24 = arith.constant 0 : index
      %25 = vector.load %arg6[%c0_23, %c0_24] : memref<4x32xf32, #tpu.memory_space<vmem>>, vector<4x32xf32>
      %cst_25 = arith.constant dense<0.000000e+00> : vector<8x32xf32>
      %26 = tpu.matmul %24, %25, %cst_25 {dimension_numbers = #tpu.dot_dimension_numbers<[1], [0], [0], [1], [0, 0, 1, 1], [], []>} : vector<8x4xf32>, vector<4x32xf32>, vector<8x32xf32> -> vector<8x32xf32>
      %c0_26 = arith.constant 0 : index
      %c0_27 = arith.constant 0 : index
      %27 = vector.load %arg7[%c0_26, %c0_27] : memref<32x1xf32, #tpu.memory_space<vmem>>, vector<32x1xf32>
      %c0_28 = arith.constant 0 : index
      %c0_29 = arith.constant 0 : index
      %28 = vector.load %arg8[%c0_28, %c0_29] : memref<1x1xf32, #tpu.memory_space<vmem>>, vector<1x1xf32>
      %29 = vector.extract_strided_slice %26 {offsets = [0, 0], sizes = [1, 32], strides = [1, 1]} : vector<8x32xf32> to vector<1x32xf32>
      %30 = vector.broadcast %29 : vector<1x32xf32> to vector<128x32xf32>
      %31 = arith.addf %23, %30 : vector<128x32xf32>
      %cst_30 = arith.constant 0.000000e+00 : f32
      %32 = vector.broadcast %cst_30 : f32 to vector<128x32xf32>
      %33 = arith.maximumf %31, %32 : vector<128x32xf32>
      %cst_31 = arith.constant dense<0.000000e+00> : vector<128x1xf32>
      %34 = tpu.matmul %33, %27, %cst_31 {dimension_numbers = #tpu.dot_dimension_numbers<[1], [0], [0], [1], [0, 0, 1, 1], [], []>} : vector<128x32xf32>, vector<32x1xf32>, vector<128x1xf32> -> vector<128x1xf32>
      %35 = vector.broadcast %28 : vector<1x1xf32> to vector<128x1xf32>
      %36 = arith.addf %34, %35 : vector<128x1xf32>
      %c0_32 = arith.constant 0 : index
      %c0_33 = arith.constant 0 : index
      %37 = vector.load %arg13[%c0_32, %c0_33] : memref<128x8xf32, #tpu.memory_space<vmem>>, vector<128x1xf32>
      tpu.vector_store %arg13[%c0_32, %c0_33], %36 {strides = array<i32>} : memref<128x8xf32, #tpu.memory_space<vmem>>, vector<128x1xf32>,
      %38 = vector.extract_strided_slice %26 {offsets = [1, 0], sizes = [1, 32], strides = [1, 1]} : vector<8x32xf32> to vector<1x32xf32>
      %39 = vector.broadcast %38 : vector<1x32xf32> to vector<128x32xf32>
      %40 = arith.addf %23, %39 : vector<128x32xf32>
      %cst_34 = arith.constant 0.000000e+00 : f32
      %41 = vector.broadcast %cst_34 : f32 to vector<128x32xf32>
      %42 = arith.maximumf %40, %41 : vector<128x32xf32>
      %cst_35 = arith.constant dense<0.000000e+00> : vector<128x1xf32>
      %43 = tpu.matmul %42, %27, %cst_35 {dimension_numbers = #tpu.dot_dimension_numbers<[1], [0], [0], [1], [0, 0, 1, 1], [], []>} : vector<128x32xf32>, vector<32x1xf32>, vector<128x1xf32> -> vector<128x1xf32>
      %44 = vector.broadcast %28 : vector<1x1xf32> to vector<128x1xf32>
      %45 = arith.addf %43, %44 : vector<128x1xf32>
      %c0_36 = arith.constant 0 : index
      %c1 = arith.constant 1 : index
      %46 = vector.load %arg13[%c0_36, %c1] : memref<128x8xf32, #tpu.memory_space<vmem>>, vector<128x1xf32>
      tpu.vector_store %arg13[%c0_36, %c1], %45 {strides = array<i32>} : memref<128x8xf32, #tpu.memory_space<vmem>>, vector<128x1xf32>,
      %47 = vector.extract_strided_slice %26 {offsets = [2, 0], sizes = [1, 32], strides = [1, 1]} : vector<8x32xf32> to vector<1x32xf32>
      %48 = vector.broadcast %47 : vector<1x32xf32> to vector<128x32xf32>
      %49 = arith.addf %23, %48 : vector<128x32xf32>
      %cst_37 = arith.constant 0.000000e+00 : f32
      %50 = vector.broadcast %cst_37 : f32 to vector<128x32xf32>
      %51 = arith.maximumf %49, %50 : vector<128x32xf32>
      %cst_38 = arith.constant dense<0.000000e+00> : vector<128x1xf32>
      %52 = tpu.matmul %51, %27, %cst_38 {dimension_numbers = #tpu.dot_dimension_numbers<[1], [0], [0], [1], [0, 0, 1, 1], [], []>} : vector<128x32xf32>, vector<32x1xf32>, vector<128x1xf32> -> vector<128x1xf32>
      %53 = vector.broadcast %28 : vector<1x1xf32> to vector<128x1xf32>
      %54 = arith.addf %52, %53 : vector<128x1xf32>
      %c0_39 = arith.constant 0 : index
      %c2 = arith.constant 2 : index
      %55 = vector.load %arg13[%c0_39, %c2] : memref<128x8xf32, #tpu.memory_space<vmem>>, vector<128x1xf32>
      tpu.vector_store %arg13[%c0_39, %c2], %54 {strides = array<i32>} : memref<128x8xf32, #tpu.memory_space<vmem>>, vector<128x1xf32>,
      %56 = vector.extract_strided_slice %26 {offsets = [3, 0], sizes = [1, 32], strides = [1, 1]} : vector<8x32xf32> to vector<1x32xf32>
      %57 = vector.broadcast %56 : vector<1x32xf32> to vector<128x32xf32>
      %58 = arith.addf %23, %57 : vector<128x32xf32>
      %cst_40 = arith.constant 0.000000e+00 : f32
      %59 = vector.broadcast %cst_40 : f32 to vector<128x32xf32>
      %60 = arith.maximumf %58, %59 : vector<128x32xf32>
      %cst_41 = arith.constant dense<0.000000e+00> : vector<128x1xf32>
      %61 = tpu.matmul %60, %27, %cst_41 {dimension_numbers = #tpu.dot_dimension_numbers<[1], [0], [0], [1], [0, 0, 1, 1], [], []>} : vector<128x32xf32>, vector<32x1xf32>, vector<128x1xf32> -> vector<128x1xf32>
      %62 = vector.broadcast %28 : vector<1x1xf32> to vector<128x1xf32>
      %63 = arith.addf %61, %62 : vector<128x1xf32>
      %c0_42 = arith.constant 0 : index
      %c3 = arith.constant 3 : index
      %64 = vector.load %arg13[%c0_42, %c3] : memref<128x8xf32, #tpu.memory_space<vmem>>, vector<128x1xf32>
      tpu.vector_store %arg13[%c0_42, %c3], %63 {strides = array<i32>} : memref<128x8xf32, #tpu.memory_space<vmem>>, vector<128x1xf32>,
      %65 = vector.extract_strided_slice %26 {offsets = [4, 0], sizes = [1, 32], strides = [1, 1]} : vector<8x32xf32> to vector<1x32xf32>
      %66 = vector.broadcast %65 : vector<1x32xf32> to vector<128x32xf32>
      %67 = arith.addf %23, %66 : vector<128x32xf32>
      %cst_43 = arith.constant 0.000000e+00 : f32
      %68 = vector.broadcast %cst_43 : f32 to vector<128x32xf32>
      %69 = arith.maximumf %67, %68 : vector<128x32xf32>
      %cst_44 = arith.constant dense<0.000000e+00> : vector<128x1xf32>
      %70 = tpu.matmul %69, %27, %cst_44 {dimension_numbers = #tpu.dot_dimension_numbers<[1], [0], [0], [1], [0, 0, 1, 1], [], []>} : vector<128x32xf32>, vector<32x1xf32>, vector<128x1xf32> -> vector<128x1xf32>
      %71 = vector.broadcast %28 : vector<1x1xf32> to vector<128x1xf32>
      %72 = arith.addf %70, %71 : vector<128x1xf32>
      %c0_45 = arith.constant 0 : index
      %c4 = arith.constant 4 : index
      %73 = vector.load %arg13[%c0_45, %c4] : memref<128x8xf32, #tpu.memory_space<vmem>>, vector<128x1xf32>
      tpu.vector_store %arg13[%c0_45, %c4], %72 {strides = array<i32>} : memref<128x8xf32, #tpu.memory_space<vmem>>, vector<128x1xf32>,
      %74 = vector.extract_strided_slice %26 {offsets = [5, 0], sizes = [1, 32], strides = [1, 1]} : vector<8x32xf32> to vector<1x32xf32>
      %75 = vector.broadcast %74 : vector<1x32xf32> to vector<128x32xf32>
      %76 = arith.addf %23, %75 : vector<128x32xf32>
      %cst_46 = arith.constant 0.000000e+00 : f32
      %77 = vector.broadcast %cst_46 : f32 to vector<128x32xf32>
      %78 = arith.maximumf %76, %77 : vector<128x32xf32>
      %cst_47 = arith.constant dense<0.000000e+00> : vector<128x1xf32>
      %79 = tpu.matmul %78, %27, %cst_47 {dimension_numbers = #tpu.dot_dimension_numbers<[1], [0], [0], [1], [0, 0, 1, 1], [], []>} : vector<128x32xf32>, vector<32x1xf32>, vector<128x1xf32> -> vector<128x1xf32>
      %80 = vector.broadcast %28 : vector<1x1xf32> to vector<128x1xf32>
      %81 = arith.addf %79, %80 : vector<128x1xf32>
      %c0_48 = arith.constant 0 : index
      %c5 = arith.constant 5 : index
      %82 = vector.load %arg13[%c0_48, %c5] : memref<128x8xf32, #tpu.memory_space<vmem>>, vector<128x1xf32>
      tpu.vector_store %arg13[%c0_48, %c5], %81 {strides = array<i32>} : memref<128x8xf32, #tpu.memory_space<vmem>>, vector<128x1xf32>,
      %83 = vector.extract_strided_slice %26 {offsets = [6, 0], sizes = [1, 32], strides = [1, 1]} : vector<8x32xf32> to vector<1x32xf32>
      %84 = vector.broadcast %83 : vector<1x32xf32> to vector<128x32xf32>
      %85 = arith.addf %23, %84 : vector<128x32xf32>
      %cst_49 = arith.constant 0.000000e+00 : f32
      %86 = vector.broadcast %cst_49 : f32 to vector<128x32xf32>
      %87 = arith.maximumf %85, %86 : vector<128x32xf32>
      %cst_50 = arith.constant dense<0.000000e+00> : vector<128x1xf32>
      %88 = tpu.matmul %87, %27, %cst_50 {dimension_numbers = #tpu.dot_dimension_numbers<[1], [0], [0], [1], [0, 0, 1, 1], [], []>} : vector<128x32xf32>, vector<32x1xf32>, vector<128x1xf32> -> vector<128x1xf32>
      %89 = vector.broadcast %28 : vector<1x1xf32> to vector<128x1xf32>
      %90 = arith.addf %88, %89 : vector<128x1xf32>
      %c0_51 = arith.constant 0 : index
      %c6 = arith.constant 6 : index
      %91 = vector.load %arg13[%c0_51, %c6] : memref<128x8xf32, #tpu.memory_space<vmem>>, vector<128x1xf32>
      tpu.vector_store %arg13[%c0_51, %c6], %90 {strides = array<i32>} : memref<128x8xf32, #tpu.memory_space<vmem>>, vector<128x1xf32>,
      %92 = vector.extract_strided_slice %26 {offsets = [7, 0], sizes = [1, 32], strides = [1, 1]} : vector<8x32xf32> to vector<1x32xf32>
      %93 = vector.broadcast %92 : vector<1x32xf32> to vector<128x32xf32>
      %94 = arith.addf %23, %93 : vector<128x32xf32>
      %cst_52 = arith.constant 0.000000e+00 : f32
      %95 = vector.broadcast %cst_52 : f32 to vector<128x32xf32>
      %96 = arith.maximumf %94, %95 : vector<128x32xf32>
      %cst_53 = arith.constant dense<0.000000e+00> : vector<128x1xf32>
      %97 = tpu.matmul %96, %27, %cst_53 {dimension_numbers = #tpu.dot_dimension_numbers<[1], [0], [0], [1], [0, 0, 1, 1], [], []>} : vector<128x32xf32>, vector<32x1xf32>, vector<128x1xf32> -> vector<128x1xf32>
      %98 = vector.broadcast %28 : vector<1x1xf32> to vector<128x1xf32>
      %99 = arith.addf %97, %98 : vector<128x1xf32>
      %c0_54 = arith.constant 0 : index
      %c7 = arith.constant 7 : index
      %100 = vector.load %arg13[%c0_54, %c7] : memref<128x8xf32, #tpu.memory_space<vmem>>, vector<128x1xf32>
      tpu.vector_store %arg13[%c0_54, %c7], %99 {strides = array<i32>} : memref<128x8xf32, #tpu.memory_space<vmem>>, vector<128x1xf32>,
      %c0_55 = arith.constant 0 : index
      %c0_56 = arith.constant 0 : index
      %101 = vector.load %arg13[%c0_55, %c0_56] : memref<128x8xf32, #tpu.memory_space<vmem>>, vector<128x8xf32>
      %c0_57 = arith.constant 0 : index
      %c0_58 = arith.constant 0 : index
      %102 = vector.load %arg9[%c0_57, %c0_58] : memref<8x128xf32, #tpu.memory_space<vmem>>, vector<8x128xf32>
      %cst_59 = arith.constant dense<0.000000e+00> : vector<8x8xf32>
      %103 = tpu.matmul %102, %101, %cst_59 {dimension_numbers = #tpu.dot_dimension_numbers<[1], [0], [0], [1], [0, 0, 1, 1], [], []>} : vector<8x128xf32>, vector<128x8xf32>, vector<8x8xf32> -> vector<8x8xf32>
      %c0_60 = arith.constant 0 : index
      %c0_61 = arith.constant 0 : index
      %104 = vector.load %arg12[%c0_60, %c0_61] : memref<8x8xf32, #tpu.memory_space<vmem>>, vector<8x8xf32>
      tpu.vector_store %arg12[%c0_60, %c0_61], %103 {strides = array<i32>} : memref<8x8xf32, #tpu.memory_space<vmem>>, vector<8x8xf32>,
      %cst_62 = arith.constant dense<0xFF800000> : vector<8xf32>
      %105 = vector.multi_reduction <maximumf>, %101, %cst_62 [0] : vector<128x8xf32> to vector<8xf32>
      %106 = vector.shape_cast %105 : vector<8xf32> to vector<1x8xf32>
      %cst_63 = arith.constant dense<0xFF800000> : vector<1xf32>
      %107 = vector.multi_reduction <maximumf>, %106, %cst_63 [1] : vector<1x8xf32> to vector<1xf32>
      %108 = vector.shape_cast %107 : vector<1xf32> to vector<1x1xf32>
      %c0_64 = arith.constant 0 : index
      %c0_65 = arith.constant 0 : index
      %109 = vector.load %arg14[%c0_64, %c0_65] : memref<1x1xf32, #tpu.memory_space<vmem>>, vector<1x1xf32>
      tpu.vector_store %arg14[%c0_64, %c0_65], %108 {strides = array<i32>} : memref<1x1xf32, #tpu.memory_space<vmem>>, vector<1x1xf32>,
      %110 = vector.broadcast %108 : vector<1x1xf32> to vector<128x8xf32>
      %111 = arith.subf %101, %110 : vector<128x8xf32>
      %112 = math.exp %111 : vector<128x8xf32>
      %c0_66 = arith.constant 0 : index
      %c0_67 = arith.constant 0 : index
      %113 = vector.load %arg13[%c0_66, %c0_67] : memref<128x8xf32, #tpu.memory_space<vmem>>, vector<128x8xf32>
      tpu.vector_store %arg13[%c0_66, %c0_67], %112 {strides = array<i32>} : memref<128x8xf32, #tpu.memory_space<vmem>>, vector<128x8xf32>,
    } else {
    }
    %c0 = arith.constant 0 : index
    %c0_1 = arith.constant 0 : index
    %3 = vector.load %arg10[%c0, %c0_1] : memref<128x128xbf16, #tpu.memory_space<vmem>>, vector<128x128xbf16>
    %4 = arith.extf %3 : vector<128x128xbf16> to vector<128x128xf32>
    %c0_2 = arith.constant 0 : index
    %c0_3 = arith.constant 0 : index
    %5 = vector.load %arg13[%c0_2, %c0_3] : memref<128x8xf32, #tpu.memory_space<vmem>>, vector<128x8xf32>
    %cst = arith.constant dense<0.000000e+00> : vector<128x8xf32>
    %6 = tpu.matmul %4, %5, %cst {dimension_numbers = #tpu.dot_dimension_numbers<[1], [0], [0], [1], [0, 0, 1, 1], [], []>} : vector<128x128xf32>, vector<128x8xf32>, vector<128x8xf32> -> vector<128x8xf32>
    %cst_4 = arith.constant 1.000000e-30 : f32
    %7 = vector.broadcast %cst_4 : f32 to vector<128x8xf32>
    %8 = arith.maximumf %6, %7 : vector<128x8xf32>
    %9 = math.log %8 : vector<128x8xf32>
    %c0_5 = arith.constant 0 : index
    %c0_6 = arith.constant 0 : index
    %10 = vector.load %arg14[%c0_5, %c0_6] : memref<1x1xf32, #tpu.memory_space<vmem>>, vector<1x1xf32>
    %11 = vector.broadcast %10 : vector<1x1xf32> to vector<128x8xf32>
    %12 = arith.addf %9, %11 : vector<128x8xf32>
    %c0_7 = arith.constant 0 : index
    %c0_8 = arith.constant 0 : index
    %13 = vector.load %arg12[%c0_7, %c0_8] : memref<8x8xf32, #tpu.memory_space<vmem>>, vector<8x8xf32>
    %c0_9 = arith.constant 0 : index
    %c0_10 = arith.constant 0 : index
    %14 = vector.load %arg11[%c0_9, %c0_10] : memref<8x128xf32, #tpu.memory_space<vmem>>, vector<8x128xf32>
    %cst_11 = arith.constant dense<0.000000e+00> : vector<8x8xf32>
    %15 = tpu.matmul %14, %12, %cst_11 {dimension_numbers = #tpu.dot_dimension_numbers<[1], [0], [0], [1], [0, 0, 1, 1], [], []>} : vector<8x128xf32>, vector<128x8xf32>, vector<8x8xf32> -> vector<8x8xf32>
    %16 = arith.addf %13, %15 : vector<8x8xf32>
    %c0_12 = arith.constant 0 : index
    %c0_13 = arith.constant 0 : index
    %17 = vector.load %arg12[%c0_12, %c0_13] : memref<8x8xf32, #tpu.memory_space<vmem>>, vector<8x8xf32>
    tpu.vector_store %arg12[%c0_12, %c0_13], %16 {strides = array<i32>} : memref<8x8xf32, #tpu.memory_space<vmem>>, vector<8x8xf32>,
    return
  }
  func.func @transform_0(%arg0: i32, %arg1: i32) -> (i32, i32) {
    %c0_i32 = arith.constant 0 : i32
    %c0_i32_0 = arith.constant 0 : i32
    return %arg0, %c0_i32 : i32, i32
  }
  func.func @transform_1(%arg0: i32, %arg1: i32) -> (i32, i32) {
    %c0_i32 = arith.constant 0 : i32
    %c0_i32_0 = arith.constant 0 : i32
    %c0_i32_1 = arith.constant 0 : i32
    return %c0_i32, %c0_i32_0 : i32, i32
  }
  func.func @transform_2(%arg0: i32, %arg1: i32) -> (i32, i32) {
    %c0_i32 = arith.constant 0 : i32
    %c0_i32_0 = arith.constant 0 : i32
    %c0_i32_1 = arith.constant 0 : i32
    return %c0_i32, %c0_i32_0 : i32, i32
  }
  func.func @transform_3(%arg0: i32, %arg1: i32) -> (i32, i32) {
    %c0_i32 = arith.constant 0 : i32
    %c0_i32_0 = arith.constant 0 : i32
    %c0_i32_1 = arith.constant 0 : i32
    return %c0_i32, %c0_i32_0 : i32, i32
  }
  func.func @transform_4(%arg0: i32, %arg1: i32) -> (i32, i32) {
    %c0_i32 = arith.constant 0 : i32
    %c0_i32_0 = arith.constant 0 : i32
    %c0_i32_1 = arith.constant 0 : i32
    return %c0_i32, %c0_i32_0 : i32, i32
  }
  func.func @transform_5(%arg0: i32, %arg1: i32) -> (i32, i32) {
    %c0_i32 = arith.constant 0 : i32
    %c0_i32_0 = arith.constant 0 : i32
    %c0_i32_1 = arith.constant 0 : i32
    return %c0_i32, %c0_i32_0 : i32, i32
  }
  func.func @transform_6(%arg0: i32, %arg1: i32) -> (i32, i32) {
    %c0_i32 = arith.constant 0 : i32
    %c0_i32_0 = arith.constant 0 : i32
    %c0_i32_1 = arith.constant 0 : i32
    return %c0_i32, %c0_i32_0 : i32, i32
  }
  func.func @transform_7(%arg0: i32, %arg1: i32) -> (i32, i32) {
    %c0_i32 = arith.constant 0 : i32
    %c0_i32_0 = arith.constant 0 : i32
    %c0_i32_1 = arith.constant 0 : i32
    return %c0_i32, %c0_i32_0 : i32, i32
  }
  func.func @transform_8(%arg0: i32, %arg1: i32) -> (i32, i32) {
    %c0_i32 = arith.constant 0 : i32
    %c0_i32_0 = arith.constant 0 : i32
    return %arg1, %c0_i32 : i32, i32
  }
  func.func @transform_9(%arg0: i32, %arg1: i32) -> (i32, i32) {
    %c0_i32 = arith.constant 0 : i32
    %c0_i32_0 = arith.constant 0 : i32
    return %c0_i32, %arg1 : i32, i32
  }
  func.func @transform_10(%arg0: i32, %arg1: i32) -> (i32, i32) {
    %c0_i32 = arith.constant 0 : i32
    %c0_i32_0 = arith.constant 0 : i32
    return %arg0, %c0_i32 : i32, i32
  }
}

</mosaic_0001>

<llo_original>
// kernel: tpu_custom_call.1
$region0: #{tpu_custom_call.1}
  #allocation0 [shape = 'u32[]', space=smem, size = 0x4, offset = 0x4, fixed_abs, tag = 'smem constant byte address 0x4 - core index']
  #allocation1 [shape = 'u32[72,128]{1,0:T(1,128)}', space=vmem, size = 0x9000, scoped, tag = 'internal scratch']
  #allocation2 [shape = 'f32[128,8]{1,0:T(8,128)}', space=vmem, size = 0x10000, scoped, tag = 'scratch operand']
  #allocation3 [shape = 'f32[1,1]{1,0:T(1,128)}', space=vmem, size = 0x200, scoped, tag = 'scratch operand']
  #allocation4 [shape = 'f32[1,1]{1,0:T(1,128)S(1)}', space=vmem, size = 0x200, scoped, tag = 'scoped memory for tpu_custom_call.1']
  %s0 = inlined_call_operand.vmem [shape: f32[8,4], index: 0, kind: input, shape index: {}]
  %s1 = inlined_call_operand.vmem [shape: f32[128,8], index: 1, kind: input, shape index: {}]
  %s2 = inlined_call_operand.vmem [shape: f32[8,32], index: 2, kind: input, shape index: {}]
  %s3 = inlined_call_operand.vmem [shape: f32[1,32], index: 3, kind: input, shape index: {}]
  %s4 = inlined_call_operand.vmem [shape: f32[4,32], index: 4, kind: input, shape index: {}]
  %s5 = inlined_call_operand.vmem [shape: f32[32,1], index: 5, kind: input, shape index: {}]
  %s6 = inlined_call_operand.<no memory space> [shape: f32[1,1], index: 6, kind: input, shape index: {}]
  %s7 = inlined_call_operand.vmem [shape: f32[8,128], index: 7, kind: input, shape index: {}]
  %s8 = inlined_call_operand.vmem [shape: bf16[128,128], index: 8, kind: input, shape index: {}]
  %s9 = inlined_call_operand.vmem [shape: f32[8,128], index: 9, kind: input, shape index: {}]
  %s10 = inlined_call_operand.hbm [shape: f32[8,8], index: 10, kind: output, shape index: {}]
  %s11 = sld [smem:[#allocation0]]
  $region54: #{tpu_custom_call.1} parent=0
    _
  %s13 = ssub.s32 1, %s11
  %s14 = scalar_select 0, %s13, %s11
  %v15 = vstv %s6
  %16 = vst [vmem:[#allocation4] sm:$0x1] %v15
  $region1: #{tpu_custom_call.1} parent=0
    #allocation5 [shape = 'u8[4096]{0}', space=vmem, size = 0x1000, scoped, tag = 'output window, operand 0, single buffered']
    #allocation6 [shape = 's32[1]{0}', space=sflag, size = 0x4, scoped, tag = 'scoped memory for tpu_custom_call.1']
    %17 = vsyncpa [#allocation6], 0
    // Predicated region
    $region2: #{tpu_custom_call.1} parent=1 // pred_check
      _
    $region3: #{tpu_custom_call.1} parent=1 // pred_check_branch
      %19 = sbr.rel (0) target = $region5
    $region4: #{tpu_custom_call.1} parent=1 // pred_region
      _
    $region5: #{tpu_custom_call.1} parent=1 // pred_fallthru
      _
    // Predicated region
    $region6: #{tpu_custom_call.1} parent=1 // pred_check
      _
    $region7: #{tpu_custom_call.1} parent=1 // pred_check_branch
      %21 = sbr.rel (0) target = $region9
    $region8: #{tpu_custom_call.1} parent=1 // pred_region
      _
    $region9: #{tpu_custom_call.1} parent=1 // pred_fallthru
      _
    // Predicated region
    $region10: #{tpu_custom_call.1} parent=1 // pred_check
      _
    $region11: #{tpu_custom_call.1} parent=1 // pred_check_branch
      %23 = sbr.rel (0) target = $region13
    $region12: #{tpu_custom_call.1} parent=1 // pred_region
      _
    $region13: #{tpu_custom_call.1} parent=1 // pred_fallthru
      _
    // Predicated region
    $region14: #{tpu_custom_call.1} parent=1 // pred_check
      _
    $region15: #{tpu_custom_call.1} parent=1 // pred_check_branch
      %25 = sbr.rel (0) target = $region17
    $region16: #{tpu_custom_call.1} parent=1 // pred_region
      _
    $region17: #{tpu_custom_call.1} parent=1 // pred_fallthru
      _
    // Predicated region
    $region18: #{tpu_custom_call.1} parent=1 // pred_check
      _
    $region19: #{tpu_custom_call.1} parent=1 // pred_check_branch
      %27 = sbr.rel (0) target = $region21
    $region20: #{tpu_custom_call.1} parent=1 // pred_region
      _
    $region21: #{tpu_custom_call.1} parent=1 // pred_fallthru
      _
    // Predicated region
    $region22: #{tpu_custom_call.1} parent=1 // pred_check
      _
    $region23: #{tpu_custom_call.1} parent=1 // pred_check_branch
      %29 = sbr.rel (0) target = $region25
    $region24: #{tpu_custom_call.1} parent=1 // pred_region
      _
    $region25: #{tpu_custom_call.1} parent=1 // pred_fallthru
      _
    // Predicated region
    $region26: #{tpu_custom_call.1} parent=1 // pred_check
      _
    $region27: #{tpu_custom_call.1} parent=1 // pred_check_branch
      %31 = sbr.rel (0) target = $region29
    $region28: #{tpu_custom_call.1} parent=1 // pred_region
      _
    $region29: #{tpu_custom_call.1} parent=1 // pred_fallthru
      _
    // Predicated region
    $region30: #{tpu_custom_call.1} parent=1 // pred_check
      _
    $region31: #{tpu_custom_call.1} parent=1 // pred_check_branch
      %33 = sbr.rel (0) target = $region33
    $region32: #{tpu_custom_call.1} parent=1 // pred_region
      _
    $region33: #{tpu_custom_call.1} parent=1 // pred_fallthru
      _
    // Predicated region
    $region34: #{tpu_custom_call.1} parent=1 // pred_check
      _
    $region35: #{tpu_custom_call.1} parent=1 // pred_check_branch
      %35 = sbr.rel (0) target = $region37
    $region36: #{tpu_custom_call.1} parent=1 // pred_region
      _
    $region37: #{tpu_custom_call.1} parent=1 // pred_fallthru
      _
    // Predicated region
    $region38: #{tpu_custom_call.1} parent=1 // pred_check
      _
    $region39: #{tpu_custom_call.1} parent=1 // pred_check_branch
      %37 = sbr.rel (0) target = $region41
    $region40: #{tpu_custom_call.1} parent=1 // pred_region
      _
    $region41: #{tpu_custom_call.1} parent=1 // pred_fallthru
      _
    %p38 = scmp.eq.s32.totalorder 0, 0
    // Predicated region
    $region42: #{tpu_custom_call.1} parent=1 // pred_check
      %p39 = pneg %p38
    $region43: #{tpu_custom_call.1} parent=1 // pred_check_branch
      %41 = sbr.rel (%p39) target = $region45
    $region44: #{tpu_custom_call.1} parent=1 // pred_region
      %v42 = vld [vmem:[%s1] sm:$0xff]
      %v43 = vld [vmem:[%s1 + $0x8] sm:$0xff]
      %v44 = vld [vmem:[%s1 + $0x10] sm:$0xff]
      %v45 = vld [vmem:[%s1 + $0x18] sm:$0xff]
      %v46 = vld [vmem:[%s1 + $0x20] sm:$0xff]
      %v47 = vld [vmem:[%s1 + $0x28] sm:$0xff]
      %v48 = vld [vmem:[%s1 + $0x30] sm:$0xff]
      %v49 = vld [vmem:[%s1 + $0x38] sm:$0xff]
      %v50 = vld [vmem:[%s1 + $0x40] sm:$0xff]
      %v51 = vld [vmem:[%s1 + $0x48] sm:$0xff]
      %v52 = vld [vmem:[%s1 + $0x50] sm:$0xff]
      %v53 = vld [vmem:[%s1 + $0x58] sm:$0xff]
      %v54 = vld [vmem:[%s1 + $0x60] sm:$0xff]
      %v55 = vld [vmem:[%s1 + $0x68] sm:$0xff]
      %v56 = vld [vmem:[%s1 + $0x70] sm:$0xff]
      %v57 = vld [vmem:[%s1 + $0x78] sm:$0xff]
      %v58 = vld [vmem:[%s2] sm:$0xff]
      %v59 = vld [vmem:[%s3] sm:$0x1]
      %v61 = vperm.slane %v59, 0
      %vm63 = vcmask 64512
      %v65 = vsel %vm63, %v42, 0
      %v68 = vsel %vm63, %v43, 0
      %v71 = vsel %vm63, %v44, 0
      %v74 = vsel %vm63, %v45, 0
      %v77 = vsel %vm63, %v46, 0
      %v80 = vsel %vm63, %v47, 0
      %v83 = vsel %vm63, %v48, 0
      %v86 = vsel %vm63, %v49, 0
      %v89 = vsel %vm63, %v50, 0
      %v92 = vsel %vm63, %v51, 0
      %v95 = vsel %vm63, %v52, 0
      %v98 = vsel %vm63, %v53, 0
      %v101 = vsel %vm63, %v54, 0
      %v104 = vsel %vm63, %v55, 0
      %v107 = vsel %vm63, %v56, 0
      %v110 = vsel %vm63, %v57, 0
      %112 = vmatpush.msra.mxu0 0.0
      %113 = vmatpush.msra.mxu0 0.0
      %114 = vmatpush.msra.mxu0 0.0
      %115 = vmatpush.msra.mxu0 0.0
      %116 = vmatpush.msra.mxu0 0.0
      %117 = vmatpush.msra.mxu0 0.0
      %118 = vmatpush.msra.mxu0 0.0
      %119 = vmatpush.msra.mxu0 0.0
      %120 = vmatpush.msra.mxu0 0.0
      %121 = vmatpush.msra.mxu0 0.0
      %122 = vmatpush.msra.mxu0 0.0
      %123 = vmatpush.msra.mxu0 0.0
      %124 = vmatpush.msra.mxu0 0.0
      %125 = vmatpush.msra.mxu0 0.0
      %126 = vmatpush.msra.mxu0 0.0
      %127 = vmatpush.msra.mxu0 %v58
      %128 = vmatmul.f32.gmra.mxu0 %v65
      %v129 = vpop.f32.mrf.mxu0
      %v130 = vadd.f32 %v61, %v129
      %131 = vmatmul.f32.gmra.mxu0 %v68
      %v132 = vpop.f32.mrf.mxu0
      %v133 = vadd.f32 %v61, %v132
      %134 = vmatmul.f32.gmra.mxu0 %v71
      %v135 = vpop.f32.mrf.mxu0
      %v136 = vadd.f32 %v61, %v135
      %137 = vmatmul.f32.gmra.mxu0 %v74
      %v138 = vpop.f32.mrf.mxu0
      %v139 = vadd.f32 %v61, %v138
      %140 = vmatmul.f32.gmra.mxu0 %v77
      %v141 = vpop.f32.mrf.mxu0
      %v142 = vadd.f32 %v61, %v141
      %143 = vmatmul.f32.gmra.mxu0 %v80
      %v144 = vpop.f32.mrf.mxu0
      %v145 = vadd.f32 %v61, %v144
      %146 = vmatmul.f32.gmra.mxu0 %v83
      %v147 = vpop.f32.mrf.mxu0
      %v148 = vadd.f32 %v61, %v147
      %149 = vmatmul.f32.gmra.mxu0 %v86
      %v150 = vpop.f32.mrf.mxu0
      %v151 = vadd.f32 %v61, %v150
      %152 = vmatmul.f32.gmra.mxu0 %v89
      %v153 = vpop.f32.mrf.mxu0
      %v154 = vadd.f32 %v61, %v153
      %155 = vmatmul.f32.gmra.mxu0 %v92
      %v156 = vpop.f32.mrf.mxu0
      %v157 = vadd.f32 %v61, %v156
      %158 = vmatmul.f32.gmra.mxu0 %v95
      %v159 = vpop.f32.mrf.mxu0
      %v160 = vadd.f32 %v61, %v159
      %161 = vmatmul.f32.gmra.mxu0 %v98
      %v162 = vpop.f32.mrf.mxu0
      %v163 = vadd.f32 %v61, %v162
      %164 = vmatmul.f32.gmra.mxu0 %v101
      %v165 = vpop.f32.mrf.mxu0
      %v166 = vadd.f32 %v61, %v165
      %167 = vmatmul.f32.gmra.mxu0 %v104
      %v168 = vpop.f32.mrf.mxu0
      %v169 = vadd.f32 %v61, %v168
      %170 = vmatmul.f32.gmra.mxu0 %v107
      %v171 = vpop.f32.mrf.mxu0
      %v172 = vadd.f32 %v61, %v171
      %173 = vmatmul.f32.gmra.mxu0 %v110
      %v174 = vpop.f32.mrf.mxu0
      %v175 = vadd.f32 %v61, %v174
      %176 = vdwg.mxu0
      %v177 = vld [vmem:[%s0] sm:$0xff]
      %v178 = vld [vmem:[%s4] sm:$0xf]
      %vm179 = vcmask 31744
      %v181 = vsel %vm179, %v177, 0
      %vm183 = vcmask 1043456
      %v185 = vsel %vm183, %v178, 0
      %187 = vmatpush.msra.mxu0 0.0
      %188 = vmatpush.msra.mxu0 0.0
      %189 = vmatpush.msra.mxu0 0.0
      %190 = vmatpush.msra.mxu0 0.0
      %191 = vmatpush.msra.mxu0 0.0
      %192 = vmatpush.msra.mxu0 0.0
      %193 = vmatpush.msra.mxu0 0.0
      %194 = vmatpush.msra.mxu0 0.0
      %195 = vmatpush.msra.mxu0 0.0
      %196 = vmatpush.msra.mxu0 0.0
      %197 = vmatpush.msra.mxu0 0.0
      %198 = vmatpush.msra.mxu0 0.0
      %199 = vmatpush.msra.mxu0 0.0
      %200 = vmatpush.msra.mxu0 0.0
      %201 = vmatpush.msra.mxu0 0.0
      %202 = vmatpush.msra.mxu0 %v185
      %203 = vmatmul.f32.gmra.mxu0 %v181
      %v204 = vpop.f32.mrf.mxu0
      %v205 = vadd.f32 0.0, %v204
      %206 = vdwg.mxu0
      %v207 = vld [vmem:[%s5] sm:$0xff]
      %v208 = vld [vmem:[%s5 + $0x8] sm:$0xff]
      %v209 = vld [vmem:[%s5 + $0x10] sm:$0xff]
      %v210 = vld [vmem:[%s5 + $0x18] sm:$0xff]
      %v211 = vld [vmem:[#allocation4] sm:$0x1]
      %v212 = vperm.slane %v205, 0
      %v213 = vadd.f32 %v130, %v212
      %v214 = vadd.f32 %v133, %v212
      %v215 = vadd.f32 %v136, %v212
      %v216 = vadd.f32 %v139, %v212
      %v217 = vadd.f32 %v142, %v212
      %v218 = vadd.f32 %v145, %v212
      %v219 = vadd.f32 %v148, %v212
      %v220 = vadd.f32 %v151, %v212
      %v221 = vadd.f32 %v154, %v212
      %v222 = vadd.f32 %v157, %v212
      %v223 = vadd.f32 %v160, %v212
      %v224 = vadd.f32 %v163, %v212
      %v225 = vadd.f32 %v166, %v212
      %v226 = vadd.f32 %v169, %v212
      %v227 = vadd.f32 %v172, %v212
      %v228 = vadd.f32 %v175, %v212
      %v229 = vmax.f32 %v213, 0.0
      %v230 = vmax.f32 %v214, 0.0
      %v231 = vmax.f32 %v215, 0.0
      %v232 = vmax.f32 %v216, 0.0
      %v233 = vmax.f32 %v217, 0.0
      %v234 = vmax.f32 %v218, 0.0
      %v235 = vmax.f32 %v219, 0.0
      %v236 = vmax.f32 %v220, 0.0
      %v237 = vmax.f32 %v221, 0.0
      %v238 = vmax.f32 %v222, 0.0
      %v239 = vmax.f32 %v223, 0.0
      %v240 = vmax.f32 %v224, 0.0
      %v241 = vmax.f32 %v225, 0.0
      %v242 = vmax.f32 %v226, 0.0
      %v243 = vmax.f32 %v227, 0.0
      %v244 = vmax.f32 %v228, 0.0
      %v246 = vperm.slane %v211, 0
      %vm248 = vcmask 261120
      %v250 = vsel %vm248, %v229, 0
      %v253 = vsel %vm248, %v230, 0
      %v256 = vsel %vm248, %v231, 0
      %v259 = vsel %vm248, %v232, 0
      %v262 = vsel %vm248, %v233, 0
      %v265 = vsel %vm248, %v234, 0
      %v268 = vsel %vm248, %v235, 0
      %v271 = vsel %vm248, %v236, 0
      %v274 = vsel %vm248, %v237, 0
      %v277 = vsel %vm248, %v238, 0
      %v280 = vsel %vm248, %v239, 0
      %v283 = vsel %vm248, %v240, 0
      %v286 = vsel %vm248, %v241, 0
      %v289 = vsel %vm248, %v242, 0
      %v292 = vsel %vm248, %v243, 0
      %v295 = vsel %vm248, %v244, 0
      %297 = vmatpush.msra.mxu0 0.0
      %298 = vmatpush.msra.mxu0 0.0
      %299 = vmatpush.msra.mxu0 0.0
      %300 = vmatpush.msra.mxu0 0.0
      %301 = vmatpush.msra.mxu0 0.0
      %302 = vmatpush.msra.mxu0 0.0
      %303 = vmatpush.msra.mxu0 0.0
      %304 = vmatpush.msra.mxu0 0.0
      %305 = vmatpush.msra.mxu0 0.0
      %306 = vmatpush.msra.mxu0 0.0
      %307 = vmatpush.msra.mxu0 0.0
      %308 = vmatpush.msra.mxu0 0.0
      %309 = vmatpush.msra.mxu0 %v210
      %310 = vmatpush.msra.mxu0 %v209
      %311 = vmatpush.msra.mxu0 %v208
      %312 = vmatpush.msra.mxu0 %v207
      %313 = vmatmul.f32.gmra.mxu0 %v250
      %v314 = vpop.f32.mrf.mxu0
      %v315 = vadd.f32 %v246, %v314
      %316 = vmatmul.f32.gmra.mxu0 %v253
      %v317 = vpop.f32.mrf.mxu0
      %v318 = vadd.f32 %v246, %v317
      %319 = vmatmul.f32.gmra.mxu0 %v256
      %v320 = vpop.f32.mrf.mxu0
      %v321 = vadd.f32 %v246, %v320
      %322 = vmatmul.f32.gmra.mxu0 %v259
      %v323 = vpop.f32.mrf.mxu0
      %v324 = vadd.f32 %v246, %v323
      %325 = vmatmul.f32.gmra.mxu0 %v262
      %v326 = vpop.f32.mrf.mxu0
      %v327 = vadd.f32 %v246, %v326
      %328 = vmatmul.f32.gmra.mxu0 %v265
      %v329 = vpop.f32.mrf.mxu0
      %v330 = vadd.f32 %v246, %v329
      %331 = vmatmul.f32.gmra.mxu0 %v268
      %v332 = vpop.f32.mrf.mxu0
      %v333 = vadd.f32 %v246, %v332
      %334 = vmatmul.f32.gmra.mxu0 %v271
      %v335 = vpop.f32.mrf.mxu0
      %v336 = vadd.f32 %v246, %v335
      %337 = vmatmul.f32.gmra.mxu0 %v274
      %v338 = vpop.f32.mrf.mxu0
      %v339 = vadd.f32 %v246, %v338
      %340 = vmatmul.f32.gmra.mxu0 %v277
      %v341 = vpop.f32.mrf.mxu0
      %v342 = vadd.f32 %v246, %v341
      %343 = vmatmul.f32.gmra.mxu0 %v280
      %v344 = vpop.f32.mrf.mxu0
      %v345 = vadd.f32 %v246, %v344
      %346 = vmatmul.f32.gmra.mxu0 %v283
      %v347 = vpop.f32.mrf.mxu0
      %v348 = vadd.f32 %v246, %v347
      %349 = vmatmul.f32.gmra.mxu0 %v286
      %v350 = vpop.f32.mrf.mxu0
      %v351 = vadd.f32 %v246, %v350
      %352 = vmatmul.f32.gmra.mxu0 %v289
      %v353 = vpop.f32.mrf.mxu0
      %v354 = vadd.f32 %v246, %v353
      %355 = vmatmul.f32.gmra.mxu0 %v292
      %v356 = vpop.f32.mrf.mxu0
      %v357 = vadd.f32 %v246, %v356
      %358 = vmatmul.f32.gmra.mxu0 %v295
      %v359 = vpop.f32.mrf.mxu0
      %v360 = vadd.f32 %v246, %v359
      %361 = vdwg.mxu0
      %vm362 = vcmask 7168
      %363 = vst.msk [vmem:[#allocation2] sm:$0xff] %vm362, %v315
      %364 = vst.msk [vmem:[#allocation2 + $0x8] sm:$0xff] %vm362, %v318
      %365 = vst.msk [vmem:[#allocation2 + $0x10] sm:$0xff] %vm362, %v321
      %366 = vst.msk [vmem:[#allocation2 + $0x18] sm:$0xff] %vm362, %v324
      %367 = vst.msk [vmem:[#allocation2 + $0x20] sm:$0xff] %vm362, %v327
      %368 = vst.msk [vmem:[#allocation2 + $0x28] sm:$0xff] %vm362, %v330
      %369 = vst.msk [vmem:[#allocation2 + $0x30] sm:$0xff] %vm362, %v333
      %370 = vst.msk [vmem:[#allocation2 + $0x38] sm:$0xff] %vm362, %v336
      %371 = vst.msk [vmem:[#allocation2 + $0x40] sm:$0xff] %vm362, %v339
      %372 = vst.msk [vmem:[#allocation2 + $0x48] sm:$0xff] %vm362, %v342
      %373 = vst.msk [vmem:[#allocation2 + $0x50] sm:$0xff] %vm362, %v345
      %374 = vst.msk [vmem:[#allocation2 + $0x58] sm:$0xff] %vm362, %v348
      %375 = vst.msk [vmem:[#allocation2 + $0x60] sm:$0xff] %vm362, %v351
      %376 = vst.msk [vmem:[#allocation2 + $0x68] sm:$0xff] %vm362, %v354
      %377 = vst.msk [vmem:[#allocation2 + $0x70] sm:$0xff] %vm362, %v357
      %378 = vst.msk [vmem:[#allocation2 + $0x78] sm:$0xff] %vm362, %v360
      %v379 = vperm.slane %v205, 1
      %v380 = vadd.f32 %v130, %v379
      %v381 = vadd.f32 %v133, %v379
      %v382 = vadd.f32 %v136, %v379
      %v383 = vadd.f32 %v139, %v379
      %v384 = vadd.f32 %v142, %v379
      %v385 = vadd.f32 %v145, %v379
      %v386 = vadd.f32 %v148, %v379
      %v387 = vadd.f32 %v151, %v379
      %v388 = vadd.f32 %v154, %v379
      %v389 = vadd.f32 %v157, %v379
      %v390 = vadd.f32 %v160, %v379
      %v391 = vadd.f32 %v163, %v379
      %v392 = vadd.f32 %v166, %v379
      %v393 = vadd.f32 %v169, %v379
      %v394 = vadd.f32 %v172, %v379
      %v395 = vadd.f32 %v175, %v379
      %v396 = vmax.f32 %v380, 0.0
      %v397 = vmax.f32 %v381, 0.0
      %v398 = vmax.f32 %v382, 0.0
      %v399 = vmax.f32 %v383, 0.0
      %v400 = vmax.f32 %v384, 0.0
      %v401 = vmax.f32 %v385, 0.0
      %v402 = vmax.f32 %v386, 0.0
      %v403 = vmax.f32 %v387, 0.0
      %v404 = vmax.f32 %v388, 0.0
      %v405 = vmax.f32 %v389, 0.0
      %v406 = vmax.f32 %v390, 0.0
      %v407 = vmax.f32 %v391, 0.0
      %v408 = vmax.f32 %v392, 0.0
      %v409 = vmax.f32 %v393, 0.0
      %v410 = vmax.f32 %v394, 0.0
      %v411 = vmax.f32 %v395, 0.0
      %v413 = vsel %vm248, %v396, 0
      %v416 = vsel %vm248, %v397, 0
      %v419 = vsel %vm248, %v398, 0
      %v422 = vsel %vm248, %v399, 0
      %v425 = vsel %vm248, %v400, 0
      %v428 = vsel %vm248, %v401, 0
      %v431 = vsel %vm248, %v402, 0
      %v434 = vsel %vm248, %v403, 0
      %v437 = vsel %vm248, %v404, 0
      %v440 = vsel %vm248, %v405, 0
      %v443 = vsel %vm248, %v406, 0
      %v446 = vsel %vm248, %v407, 0
      %v449 = vsel %vm248, %v408, 0
      %v452 = vsel %vm248, %v409, 0
      %v455 = vsel %vm248, %v410, 0
      %v458 = vsel %vm248, %v411, 0
      %460 = vmatpush.msra.mxu0 0.0
      %461 = vmatpush.msra.mxu0 0.0
      %462 = vmatpush.msra.mxu0 0.0
      %463 = vmatpush.msra.mxu0 0.0
      %464 = vmatpush.msra.mxu0 0.0
      %465 = vmatpush.msra.mxu0 0.0
      %466 = vmatpush.msra.mxu0 0.0
      %467 = vmatpush.msra.mxu0 0.0
      %468 = vmatpush.msra.mxu0 0.0
      %469 = vmatpush.msra.mxu0 0.0
      %470 = vmatpush.msra.mxu0 0.0
      %471 = vmatpush.msra.mxu0 0.0
      %472 = vmatpush.msra.mxu0 %v210
      %473 = vmatpush.msra.mxu0 %v209
      %474 = vmatpush.msra.mxu0 %v208
      %475 = vmatpush.msra.mxu0 %v207
      %476 = vmatmul.f32.gmra.mxu0 %v413
      %v477 = vpop.f32.mrf.mxu0
      %v478 = vadd.f32 %v246, %v477
      %479 = vmatmul.f32.gmra.mxu0 %v416
      %v480 = vpop.f32.mrf.mxu0
      %v481 = vadd.f32 %v246, %v480
      %482 = vmatmul.f32.gmra.mxu0 %v419
      %v483 = vpop.f32.mrf.mxu0
      %v484 = vadd.f32 %v246, %v483
      %485 = vmatmul.f32.gmra.mxu0 %v422
      %v486 = vpop.f32.mrf.mxu0
      %v487 = vadd.f32 %v246, %v486
      %488 = vmatmul.f32.gmra.mxu0 %v425
      %v489 = vpop.f32.mrf.mxu0
      %v490 = vadd.f32 %v246, %v489
      %491 = vmatmul.f32.gmra.mxu0 %v428
      %v492 = vpop.f32.mrf.mxu0
      %v493 = vadd.f32 %v246, %v492
      %494 = vmatmul.f32.gmra.mxu0 %v431
      %v495 = vpop.f32.mrf.mxu0
      %v496 = vadd.f32 %v246, %v495
      %497 = vmatmul.f32.gmra.mxu0 %v434
      %v498 = vpop.f32.mrf.mxu0
      %v499 = vadd.f32 %v246, %v498
      %500 = vmatmul.f32.gmra.mxu0 %v437
      %v501 = vpop.f32.mrf.mxu0
      %v502 = vadd.f32 %v246, %v501
      %503 = vmatmul.f32.gmra.mxu0 %v440
      %v504 = vpop.f32.mrf.mxu0
      %v505 = vadd.f32 %v246, %v504
      %506 = vmatmul.f32.gmra.mxu0 %v443
      %v507 = vpop.f32.mrf.mxu0
      %v508 = vadd.f32 %v246, %v507
      %509 = vmatmul.f32.gmra.mxu0 %v446
      %v510 = vpop.f32.mrf.mxu0
      %v511 = vadd.f32 %v246, %v510
      %512 = vmatmul.f32.gmra.mxu0 %v449
      %v513 = vpop.f32.mrf.mxu0
      %v514 = vadd.f32 %v246, %v513
      %515 = vmatmul.f32.gmra.mxu0 %v452
      %v516 = vpop.f32.mrf.mxu0
      %v517 = vadd.f32 %v246, %v516
      %518 = vmatmul.f32.gmra.mxu0 %v455
      %v519 = vpop.f32.mrf.mxu0
      %v520 = vadd.f32 %v246, %v519
      %521 = vmatmul.f32.gmra.mxu0 %v458
      %v522 = vpop.f32.mrf.mxu0
      %v523 = vadd.f32 %v246, %v522
      %524 = vdwg.mxu0
      %541 = vrot.lane.b32.xlu0 %v478, 1
      %v542 = vpop.permute.xlu0 %541
      %543 = vrot.lane.b32.xlu0 %v481, 1
      %v544 = vpop.permute.xlu0 %543
      %545 = vrot.lane.b32.xlu0 %v484, 1
      %v546 = vpop.permute.xlu0 %545
      %547 = vrot.lane.b32.xlu0 %v487, 1
      %v548 = vpop.permute.xlu0 %547
      %549 = vrot.lane.b32.xlu0 %v490, 1
      %v550 = vpop.permute.xlu0 %549
      %551 = vrot.lane.b32.xlu0 %v493, 1
      %v552 = vpop.permute.xlu0 %551
      %553 = vrot.lane.b32.xlu0 %v496, 1
      %v554 = vpop.permute.xlu0 %553
      %555 = vrot.lane.b32.xlu0 %v499, 1
      %v556 = vpop.permute.xlu0 %555
      %557 = vrot.lane.b32.xlu0 %v502, 1
      %v558 = vpop.permute.xlu0 %557
      %559 = vrot.lane.b32.xlu0 %v505, 1
      %v560 = vpop.permute.xlu0 %559
      %561 = vrot.lane.b32.xlu0 %v508, 1
      %v562 = vpop.permute.xlu0 %561
      %563 = vrot.lane.b32.xlu0 %v511, 1
      %v564 = vpop.permute.xlu0 %563
      %565 = vrot.lane.b32.xlu0 %v514, 1
      %v566 = vpop.permute.xlu0 %565
      %567 = vrot.lane.b32.xlu0 %v517, 1
      %v568 = vpop.permute.xlu0 %567
      %569 = vrot.lane.b32.xlu0 %v520, 1
      %v570 = vpop.permute.xlu0 %569
      %571 = vrot.lane.b32.xlu0 %v523, 1
      %v572 = vpop.permute.xlu0 %571
      %vm589 = vcmask 15368
      %590 = vst.msk [vmem:[#allocation2] sm:$0xff] %vm589, %v542
      %591 = vst.msk [vmem:[#allocation2 + $0x8] sm:$0xff] %vm589, %v544
      %592 = vst.msk [vmem:[#allocation2 + $0x10] sm:$0xff] %vm589, %v546
      %593 = vst.msk [vmem:[#allocation2 + $0x18] sm:$0xff] %vm589, %v548
      %594 = vst.msk [vmem:[#allocation2 + $0x20] sm:$0xff] %vm589, %v550
      %595 = vst.msk [vmem:[#allocation2 + $0x28] sm:$0xff] %vm589, %v552
      %596 = vst.msk [vmem:[#allocation2 + $0x30] sm:$0xff] %vm589, %v554
      %597 = vst.msk [vmem:[#allocation2 + $0x38] sm:$0xff] %vm589, %v556
      %598 = vst.msk [vmem:[#allocation2 + $0x40] sm:$0xff] %vm589, %v558
      %599 = vst.msk [vmem:[#allocation2 + $0x48] sm:$0xff] %vm589, %v560
      %600 = vst.msk [vmem:[#allocation2 + $0x50] sm:$0xff] %vm589, %v562
      %601 = vst.msk [vmem:[#allocation2 + $0x58] sm:$0xff] %vm589, %v564
      %602 = vst.msk [vmem:[#allocation2 + $0x60] sm:$0xff] %vm589, %v566
      %603 = vst.msk [vmem:[#allocation2 + $0x68] sm:$0xff] %vm589, %v568
      %604 = vst.msk [vmem:[#allocation2 + $0x70] sm:$0xff] %vm589, %v570
      %605 = vst.msk [vmem:[#allocation2 + $0x78] sm:$0xff] %vm589, %v572
      %v606 = vperm.slane %v205, 2
      %v607 = vadd.f32 %v130, %v606
      %v608 = vadd.f32 %v133, %v606
      %v609 = vadd.f32 %v136, %v606
      %v610 = vadd.f32 %v139, %v606
      %v611 = vadd.f32 %v142, %v606
      %v612 = vadd.f32 %v145, %v606
      %v613 = vadd.f32 %v148, %v606
      %v614 = vadd.f32 %v151, %v606
      %v615 = vadd.f32 %v154, %v606
      %v616 = vadd.f32 %v157, %v606
      %v617 = vadd.f32 %v160, %v606
      %v618 = vadd.f32 %v163, %v606
      %v619 = vadd.f32 %v166, %v606
      %v620 = vadd.f32 %v169, %v606
      %v621 = vadd.f32 %v172, %v606
      %v622 = vadd.f32 %v175, %v606
      %v623 = vmax.f32 %v607, 0.0
      %v624 = vmax.f32 %v608, 0.0
      %v625 = vmax.f32 %v609, 0.0
      %v626 = vmax.f32 %v610, 0.0
      %v627 = vmax.f32 %v611, 0.0
      %v628 = vmax.f32 %v612, 0.0
      %v629 = vmax.f32 %v613, 0.0
      %v630 = vmax.f32 %v614, 0.0
      %v631 = vmax.f32 %v615, 0.0
      %v632 = vmax.f32 %v616, 0.0
      %v633 = vmax.f32 %v617, 0.0
      %v634 = vmax.f32 %v618, 0.0
      %v635 = vmax.f32 %v619, 0.0
      %v636 = vmax.f32 %v620, 0.0
      %v637 = vmax.f32 %v621, 0.0
      %v638 = vmax.f32 %v622, 0.0
      %v640 = vsel %vm248, %v623, 0
      %v643 = vsel %vm248, %v624, 0
      %v646 = vsel %vm248, %v625, 0
      %v649 = vsel %vm248, %v626, 0
      %v652 = vsel %vm248, %v627, 0
      %v655 = vsel %vm248, %v628, 0
      %v658 = vsel %vm248, %v629, 0
      %v661 = vsel %vm248, %v630, 0
      %v664 = vsel %vm248, %v631, 0
      %v667 = vsel %vm248, %v632, 0
      %v670 = vsel %vm248, %v633, 0
      %v673 = vsel %vm248, %v634, 0
      %v676 = vsel %vm248, %v635, 0
      %v679 = vsel %vm248, %v636, 0
      %v682 = vsel %vm248, %v637, 0
      %v685 = vsel %vm248, %v638, 0
      %687 = vmatpush.msra.mxu0 0.0
      %688 = vmatpush.msra.mxu0 0.0
      %689 = vmatpush.msra.mxu0 0.0
      %690 = vmatpush.msra.mxu0 0.0
      %691 = vmatpush.msra.mxu0 0.0
      %692 = vmatpush.msra.mxu0 0.0
      %693 = vmatpush.msra.mxu0 0.0
      %694 = vmatpush.msra.mxu0 0.0
      %695 = vmatpush.msra.mxu0 0.0
      %696 = vmatpush.msra.mxu0 0.0
      %697 = vmatpush.msra.mxu0 0.0
      %698 = vmatpush.msra.mxu0 0.0
      %699 = vmatpush.msra.mxu0 %v210
      %700 = vmatpush.msra.mxu0 %v209
      %701 = vmatpush.msra.mxu0 %v208
      %702 = vmatpush.msra.mxu0 %v207
      %703 = vmatmul.f32.gmra.mxu0 %v640
      %v704 = vpop.f32.mrf.mxu0
      %v705 = vadd.f32 %v246, %v704
      %706 = vmatmul.f32.gmra.mxu0 %v643
      %v707 = vpop.f32.mrf.mxu0
      %v708 = vadd.f32 %v246, %v707
      %709 = vmatmul.f32.gmra.mxu0 %v646
      %v710 = vpop.f32.mrf.mxu0
      %v711 = vadd.f32 %v246, %v710
      %712 = vmatmul.f32.gmra.mxu0 %v649
      %v713 = vpop.f32.mrf.mxu0
      %v714 = vadd.f32 %v246, %v713
      %715 = vmatmul.f32.gmra.mxu0 %v652
      %v716 = vpop.f32.mrf.mxu0
      %v717 = vadd.f32 %v246, %v716
      %718 = vmatmul.f32.gmra.mxu0 %v655
      %v719 = vpop.f32.mrf.mxu0
      %v720 = vadd.f32 %v246, %v719
      %721 = vmatmul.f32.gmra.mxu0 %v658
      %v722 = vpop.f32.mrf.mxu0
      %v723 = vadd.f32 %v246, %v722
      %724 = vmatmul.f32.gmra.mxu0 %v661
      %v725 = vpop.f32.mrf.mxu0
      %v726 = vadd.f32 %v246, %v725
      %727 = vmatmul.f32.gmra.mxu0 %v664
      %v728 = vpop.f32.mrf.mxu0
      %v729 = vadd.f32 %v246, %v728
      %730 = vmatmul.f32.gmra.mxu0 %v667
      %v731 = vpop.f32.mrf.mxu0
      %v732 = vadd.f32 %v246, %v731
      %733 = vmatmul.f32.gmra.mxu0 %v670
      %v734 = vpop.f32.mrf.mxu0
      %v735 = vadd.f32 %v246, %v734
      %736 = vmatmul.f32.gmra.mxu0 %v673
      %v737 = vpop.f32.mrf.mxu0
      %v738 = vadd.f32 %v246, %v737
      %739 = vmatmul.f32.gmra.mxu0 %v676
      %v740 = vpop.f32.mrf.mxu0
      %v741 = vadd.f32 %v246, %v740
      %742 = vmatmul.f32.gmra.mxu0 %v679
      %v743 = vpop.f32.mrf.mxu0
      %v744 = vadd.f32 %v246, %v743
      %745 = vmatmul.f32.gmra.mxu0 %v682
      %v746 = vpop.f32.mrf.mxu0
      %v747 = vadd.f32 %v246, %v746
      %748 = vmatmul.f32.gmra.mxu0 %v685
      %v749 = vpop.f32.mrf.mxu0
      %v750 = vadd.f32 %v246, %v749
      %751 = vdwg.mxu0
      %768 = vrot.lane.b32.xlu0 %v705, 2
      %v769 = vpop.permute.xlu0 %768
      %770 = vrot.lane.b32.xlu0 %v708, 2
      %v771 = vpop.permute.xlu0 %770
      %772 = vrot.lane.b32.xlu0 %v711, 2
      %v773 = vpop.permute.xlu0 %772
      %774 = vrot.lane.b32.xlu0 %v714, 2
      %v775 = vpop.permute.xlu0 %774
      %776 = vrot.lane.b32.xlu0 %v717, 2
      %v777 = vpop.permute.xlu0 %776
      %778 = vrot.lane.b32.xlu0 %v720, 2
      %v779 = vpop.permute.xlu0 %778
      %780 = vrot.lane.b32.xlu0 %v723, 2
      %v781 = vpop.permute.xlu0 %780
      %782 = vrot.lane.b32.xlu0 %v726, 2
      %v783 = vpop.permute.xlu0 %782
      %784 = vrot.lane.b32.xlu0 %v729, 2
      %v785 = vpop.permute.xlu0 %784
      %786 = vrot.lane.b32.xlu0 %v732, 2
      %v787 = vpop.permute.xlu0 %786
      %788 = vrot.lane.b32.xlu0 %v735, 2
      %v789 = vpop.permute.xlu0 %788
      %790 = vrot.lane.b32.xlu0 %v738, 2
      %v791 = vpop.permute.xlu0 %790
      %792 = vrot.lane.b32.xlu0 %v741, 2
      %v793 = vpop.permute.xlu0 %792
      %794 = vrot.lane.b32.xlu0 %v744, 2
      %v795 = vpop.permute.xlu0 %794
      %796 = vrot.lane.b32.xlu0 %v747, 2
      %v797 = vpop.permute.xlu0 %796
      %798 = vrot.lane.b32.xlu0 %v750, 2
      %v799 = vpop.permute.xlu0 %798
      %vm816 = vcmask 23568
      %817 = vst.msk [vmem:[#allocation2] sm:$0xff] %vm816, %v769
      %818 = vst.msk [vmem:[#allocation2 + $0x8] sm:$0xff] %vm816, %v771
      %819 = vst.msk [vmem:[#allocation2 + $0x10] sm:$0xff] %vm816, %v773
      %820 = vst.msk [vmem:[#allocation2 + $0x18] sm:$0xff] %vm816, %v775
      %821 = vst.msk [vmem:[#allocation2 + $0x20] sm:$0xff] %vm816, %v777
      %822 = vst.msk [vmem:[#allocation2 + $0x28] sm:$0xff] %vm816, %v779
      %823 = vst.msk [vmem:[#allocation2 + $0x30] sm:$0xff] %vm816, %v781
      %824 = vst.msk [vmem:[#allocation2 + $0x38] sm:$0xff] %vm816, %v783
      %825 = vst.msk [vmem:[#allocation2 + $0x40] sm:$0xff] %vm816, %v785
      %826 = vst.msk [vmem:[#allocation2 + $0x48] sm:$0xff] %vm816, %v787
      %827 = vst.msk [vmem:[#allocation2 + $0x50] sm:$0xff] %vm816, %v789
      %828 = vst.msk [vmem:[#allocation2 + $0x58] sm:$0xff] %vm816, %v791
      %829 = vst.msk [vmem:[#allocation2 + $0x60] sm:$0xff] %vm816, %v793
      %830 = vst.msk [vmem:[#allocation2 + $0x68] sm:$0xff] %vm816, %v795
      %831 = vst.msk [vmem:[#allocation2 + $0x70] sm:$0xff] %vm816, %v797
      %832 = vst.msk [vmem:[#allocation2 + $0x78] sm:$0xff] %vm816, %v799
      %v833 = vperm.slane %v205, 3
      %v834 = vadd.f32 %v130, %v833
      %v835 = vadd.f32 %v133, %v833
      %v836 = vadd.f32 %v136, %v833
      %v837 = vadd.f32 %v139, %v833
      %v838 = vadd.f32 %v142, %v833
      %v839 = vadd.f32 %v145, %v833
      %v840 = vadd.f32 %v148, %v833
      %v841 = vadd.f32 %v151, %v833
      %v842 = vadd.f32 %v154, %v833
      %v843 = vadd.f32 %v157, %v833
      %v844 = vadd.f32 %v160, %v833
      %v845 = vadd.f32 %v163, %v833
      %v846 = vadd.f32 %v166, %v833
      %v847 = vadd.f32 %v169, %v833
      %v848 = vadd.f32 %v172, %v833
      %v849 = vadd.f32 %v175, %v833
      %v850 = vmax.f32 %v834, 0.0
      %v851 = vmax.f32 %v835, 0.0
      %v852 = vmax.f32 %v836, 0.0
      %v853 = vmax.f32 %v837, 0.0
      %v854 = vmax.f32 %v838, 0.0
      %v855 = vmax.f32 %v839, 0.0
      %v856 = vmax.f32 %v840, 0.0
      %v857 = vmax.f32 %v841, 0.0
      %v858 = vmax.f32 %v842, 0.0
      %v859 = vmax.f32 %v843, 0.0
      %v860 = vmax.f32 %v844, 0.0
      %v861 = vmax.f32 %v845, 0.0
      %v862 = vmax.f32 %v846, 0.0
      %v863 = vmax.f32 %v847, 0.0
      %v864 = vmax.f32 %v848, 0.0
      %v865 = vmax.f32 %v849, 0.0
      %v867 = vsel %vm248, %v850, 0
      %v870 = vsel %vm248, %v851, 0
      %v873 = vsel %vm248, %v852, 0
      %v876 = vsel %vm248, %v853, 0
      %v879 = vsel %vm248, %v854, 0
      %v882 = vsel %vm248, %v855, 0
      %v885 = vsel %vm248, %v856, 0
      %v888 = vsel %vm248, %v857, 0
      %v891 = vsel %vm248, %v858, 0
      %v894 = vsel %vm248, %v859, 0
      %v897 = vsel %vm248, %v860, 0
      %v900 = vsel %vm248, %v861, 0
      %v903 = vsel %vm248, %v862, 0
      %v906 = vsel %vm248, %v863, 0
      %v909 = vsel %vm248, %v864, 0
      %v912 = vsel %vm248, %v865, 0
      %914 = vmatpush.msra.mxu0 0.0
      %915 = vmatpush.msra.mxu0 0.0
      %916 = vmatpush.msra.mxu0 0.0
      %917 = vmatpush.msra.mxu0 0.0
      %918 = vmatpush.msra.mxu0 0.0
      %919 = vmatpush.msra.mxu0 0.0
      %920 = vmatpush.msra.mxu0 0.0
      %921 = vmatpush.msra.mxu0 0.0
      %922 = vmatpush.msra.mxu0 0.0
      %923 = vmatpush.msra.mxu0 0.0
      %924 = vmatpush.msra.mxu0 0.0
      %925 = vmatpush.msra.mxu0 0.0
      %926 = vmatpush.msra.mxu0 %v210
      %927 = vmatpush.msra.mxu0 %v209
      %928 = vmatpush.msra.mxu0 %v208
      %929 = vmatpush.msra.mxu0 %v207
      %930 = vmatmul.f32.gmra.mxu0 %v867
      %v931 = vpop.f32.mrf.mxu0
      %v932 = vadd.f32 %v246, %v931
      %933 = vmatmul.f32.gmra.mxu0 %v870
      %v934 = vpop.f32.mrf.mxu0
      %v935 = vadd.f32 %v246, %v934
      %936 = vmatmul.f32.gmra.mxu0 %v873
      %v937 = vpop.f32.mrf.mxu0
      %v938 = vadd.f32 %v246, %v937
      %939 = vmatmul.f32.gmra.mxu0 %v876
      %v940 = vpop.f32.mrf.mxu0
      %v941 = vadd.f32 %v246, %v940
      %942 = vmatmul.f32.gmra.mxu0 %v879
      %v943 = vpop.f32.mrf.mxu0
      %v944 = vadd.f32 %v246, %v943
      %945 = vmatmul.f32.gmra.mxu0 %v882
      %v946 = vpop.f32.mrf.mxu0
      %v947 = vadd.f32 %v246, %v946
      %948 = vmatmul.f32.gmra.mxu0 %v885
      %v949 = vpop.f32.mrf.mxu0
      %v950 = vadd.f32 %v246, %v949
      %951 = vmatmul.f32.gmra.mxu0 %v888
      %v952 = vpop.f32.mrf.mxu0
      %v953 = vadd.f32 %v246, %v952
      %954 = vmatmul.f32.gmra.mxu0 %v891
      %v955 = vpop.f32.mrf.mxu0
      %v956 = vadd.f32 %v246, %v955
      %957 = vmatmul.f32.gmra.mxu0 %v894
      %v958 = vpop.f32.mrf.mxu0
      %v959 = vadd.f32 %v246, %v958
      %960 = vmatmul.f32.gmra.mxu0 %v897
      %v961 = vpop.f32.mrf.mxu0
      %v962 = vadd.f32 %v246, %v961
      %963 = vmatmul.f32.gmra.mxu0 %v900
      %v964 = vpop.f32.mrf.mxu0
      %v965 = vadd.f32 %v246, %v964
      %966 = vmatmul.f32.gmra.mxu0 %v903
      %v967 = vpop.f32.mrf.mxu0
      %v968 = vadd.f32 %v246, %v967
      %969 = vmatmul.f32.gmra.mxu0 %v906
      %v970 = vpop.f32.mrf.mxu0
      %v971 = vadd.f32 %v246, %v970
      %972 = vmatmul.f32.gmra.mxu0 %v909
      %v973 = vpop.f32.mrf.mxu0
      %v974 = vadd.f32 %v246, %v973
      %975 = vmatmul.f32.gmra.mxu0 %v912
      %v976 = vpop.f32.mrf.mxu0
      %v977 = vadd.f32 %v246, %v976
      %978 = vdwg.mxu0
      %995 = vrot.lane.b32.xlu0 %v932, 3
      %v996 = vpop.permute.xlu0 %995
      %997 = vrot.lane.b32.xlu0 %v935, 3
      %v998 = vpop.permute.xlu0 %997
      %999 = vrot.lane.b32.xlu0 %v938, 3
      %v1000 = vpop.permute.xlu0 %999
      %1001 = vrot.lane.b32.xlu0 %v941, 3
      %v1002 = vpop.permute.xlu0 %1001
      %1003 = vrot.lane.b32.xlu0 %v944, 3
      %v1004 = vpop.permute.xlu0 %1003
      %1005 = vrot.lane.b32.xlu0 %v947, 3
      %v1006 = vpop.permute.xlu0 %1005
      %1007 = vrot.lane.b32.xlu0 %v950, 3
      %v1008 = vpop.permute.xlu0 %1007
      %1009 = vrot.lane.b32.xlu0 %v953, 3
      %v1010 = vpop.permute.xlu0 %1009
      %1011 = vrot.lane.b32.xlu0 %v956, 3
      %v1012 = vpop.permute.xlu0 %1011
      %1013 = vrot.lane.b32.xlu0 %v959, 3
      %v1014 = vpop.permute.xlu0 %1013
      %1015 = vrot.lane.b32.xlu0 %v962, 3
      %v1016 = vpop.permute.xlu0 %1015
      %1017 = vrot.lane.b32.xlu0 %v965, 3
      %v1018 = vpop.permute.xlu0 %1017
      %1019 = vrot.lane.b32.xlu0 %v968, 3
      %v1020 = vpop.permute.xlu0 %1019
      %1021 = vrot.lane.b32.xlu0 %v971, 3
      %v1022 = vpop.permute.xlu0 %1021
      %1023 = vrot.lane.b32.xlu0 %v974, 3
      %v1024 = vpop.permute.xlu0 %1023
      %1025 = vrot.lane.b32.xlu0 %v977, 3
      %v1026 = vpop.permute.xlu0 %1025
      %vm1043 = vcmask 31768
      %1044 = vst.msk [vmem:[#allocation2] sm:$0xff] %vm1043, %v996
      %1045 = vst.msk [vmem:[#allocation2 + $0x8] sm:$0xff] %vm1043, %v998
      %1046 = vst.msk [vmem:[#allocation2 + $0x10] sm:$0xff] %vm1043, %v1000
      %1047 = vst.msk [vmem:[#allocation2 + $0x18] sm:$0xff] %vm1043, %v1002
      %1048 = vst.msk [vmem:[#allocation2 + $0x20] sm:$0xff] %vm1043, %v1004
      %1049 = vst.msk [vmem:[#allocation2 + $0x28] sm:$0xff] %vm1043, %v1006
      %1050 = vst.msk [vmem:[#allocation2 + $0x30] sm:$0xff] %vm1043, %v1008
      %1051 = vst.msk [vmem:[#allocation2 + $0x38] sm:$0xff] %vm1043, %v1010
      %1052 = vst.msk [vmem:[#allocation2 + $0x40] sm:$0xff] %vm1043, %v1012
      %1053 = vst.msk [vmem:[#allocation2 + $0x48] sm:$0xff] %vm1043, %v1014
      %1054 = vst.msk [vmem:[#allocation2 + $0x50] sm:$0xff] %vm1043, %v1016
      %1055 = vst.msk [vmem:[#allocation2 + $0x58] sm:$0xff] %vm1043, %v1018
      %1056 = vst.msk [vmem:[#allocation2 + $0x60] sm:$0xff] %vm1043, %v1020
      %1057 = vst.msk [vmem:[#allocation2 + $0x68] sm:$0xff] %vm1043, %v1022
      %1058 = vst.msk [vmem:[#allocation2 + $0x70] sm:$0xff] %vm1043, %v1024
      %1059 = vst.msk [vmem:[#allocation2 + $0x78] sm:$0xff] %vm1043, %v1026
      %v1060 = vperm.slane %v205, 4
      %v1061 = vadd.f32 %v130, %v1060
      %v1062 = vadd.f32 %v133, %v1060
      %v1063 = vadd.f32 %v136, %v1060
      %v1064 = vadd.f32 %v139, %v1060
      %v1065 = vadd.f32 %v142, %v1060
      %v1066 = vadd.f32 %v145, %v1060
      %v1067 = vadd.f32 %v148, %v1060
      %v1068 = vadd.f32 %v151, %v1060
      %v1069 = vadd.f32 %v154, %v1060
      %v1070 = vadd.f32 %v157, %v1060
      %v1071 = vadd.f32 %v160, %v1060
      %v1072 = vadd.f32 %v163, %v1060
      %v1073 = vadd.f32 %v166, %v1060
      %v1074 = vadd.f32 %v169, %v1060
      %v1075 = vadd.f32 %v172, %v1060
      %v1076 = vadd.f32 %v175, %v1060
      %v1077 = vmax.f32 %v1061, 0.0
      %v1078 = vmax.f32 %v1062, 0.0
      %v1079 = vmax.f32 %v1063, 0.0
      %v1080 = vmax.f32 %v1064, 0.0
      %v1081 = vmax.f32 %v1065, 0.0
      %v1082 = vmax.f32 %v1066, 0.0
      %v1083 = vmax.f32 %v1067, 0.0
      %v1084 = vmax.f32 %v1068, 0.0
      %v1085 = vmax.f32 %v1069, 0.0
      %v1086 = vmax.f32 %v1070, 0.0
      %v1087 = vmax.f32 %v1071, 0.0
      %v1088 = vmax.f32 %v1072, 0.0
      %v1089 = vmax.f32 %v1073, 0.0
      %v1090 = vmax.f32 %v1074, 0.0
      %v1091 = vmax.f32 %v1075, 0.0
      %v1092 = vmax.f32 %v1076, 0.0
      %v1094 = vsel %vm248, %v1077, 0
      %v1097 = vsel %vm248, %v1078, 0
      %v1100 = vsel %vm248, %v1079, 0
      %v1103 = vsel %vm248, %v1080, 0
      %v1106 = vsel %vm248, %v1081, 0
      %v1109 = vsel %vm248, %v1082, 0
      %v1112 = vsel %vm248, %v1083, 0
      %v1115 = vsel %vm248, %v1084, 0
      %v1118 = vsel %vm248, %v1085, 0
      %v1121 = vsel %vm248, %v1086, 0
      %v1124 = vsel %vm248, %v1087, 0
      %v1127 = vsel %vm248, %v1088, 0
      %v1130 = vsel %vm248, %v1089, 0
      %v1133 = vsel %vm248, %v1090, 0
      %v1136 = vsel %vm248, %v1091, 0
      %v1139 = vsel %vm248, %v1092, 0
      %1141 = vmatpush.msra.mxu0 0.0
      %1142 = vmatpush.msra.mxu0 0.0
      %1143 = vmatpush.msra.mxu0 0.0
      %1144 = vmatpush.msra.mxu0 0.0
      %1145 = vmatpush.msra.mxu0 0.0
      %1146 = vmatpush.msra.mxu0 0.0
      %1147 = vmatpush.msra.mxu0 0.0
      %1148 = vmatpush.msra.mxu0 0.0
      %1149 = vmatpush.msra.mxu0 0.0
      %1150 = vmatpush.msra.mxu0 0.0
      %1151 = vmatpush.msra.mxu0 0.0
      %1152 = vmatpush.msra.mxu0 0.0
      %1153 = vmatpush.msra.mxu0 %v210
      %1154 = vmatpush.msra.mxu0 %v209
      %1155 = vmatpush.msra.mxu0 %v208
      %1156 = vmatpush.msra.mxu0 %v207
      %1157 = vmatmul.f32.gmra.mxu0 %v1094
      %v1158 = vpop.f32.mrf.mxu0
      %v1159 = vadd.f32 %v246, %v1158
      %1160 = vmatmul.f32.gmra.mxu0 %v1097
      %v1161 = vpop.f32.mrf.mxu0
      %v1162 = vadd.f32 %v246, %v1161
      %1163 = vmatmul.f32.gmra.mxu0 %v1100
      %v1164 = vpop.f32.mrf.mxu0
      %v1165 = vadd.f32 %v246, %v1164
      %1166 = vmatmul.f32.gmra.mxu0 %v1103
      %v1167 = vpop.f32.mrf.mxu0
      %v1168 = vadd.f32 %v246, %v1167
      %1169 = vmatmul.f32.gmra.mxu0 %v1106
      %v1170 = vpop.f32.mrf.mxu0
      %v1171 = vadd.f32 %v246, %v1170
      %1172 = vmatmul.f32.gmra.mxu0 %v1109
      %v1173 = vpop.f32.mrf.mxu0
      %v1174 = vadd.f32 %v246, %v1173
      %1175 = vmatmul.f32.gmra.mxu0 %v1112
      %v1176 = vpop.f32.mrf.mxu0
      %v1177 = vadd.f32 %v246, %v1176
      %1178 = vmatmul.f32.gmra.mxu0 %v1115
      %v1179 = vpop.f32.mrf.mxu0
      %v1180 = vadd.f32 %v246, %v1179
      %1181 = vmatmul.f32.gmra.mxu0 %v1118
      %v1182 = vpop.f32.mrf.mxu0
      %v1183 = vadd.f32 %v246, %v1182
      %1184 = vmatmul.f32.gmra.mxu0 %v1121
      %v1185 = vpop.f32.mrf.mxu0
      %v1186 = vadd.f32 %v246, %v1185
      %1187 = vmatmul.f32.gmra.mxu0 %v1124
      %v1188 = vpop.f32.mrf.mxu0
      %v1189 = vadd.f32 %v246, %v1188
      %1190 = vmatmul.f32.gmra.mxu0 %v1127
      %v1191 = vpop.f32.mrf.mxu0
      %v1192 = vadd.f32 %v246, %v1191
      %1193 = vmatmul.f32.gmra.mxu0 %v1130
      %v1194 = vpop.f32.mrf.mxu0
      %v1195 = vadd.f32 %v246, %v1194
      %1196 = vmatmul.f32.gmra.mxu0 %v1133
      %v1197 = vpop.f32.mrf.mxu0
      %v1198 = vadd.f32 %v246, %v1197
      %1199 = vmatmul.f32.gmra.mxu0 %v1136
      %v1200 = vpop.f32.mrf.mxu0
      %v1201 = vadd.f32 %v246, %v1200
      %1202 = vmatmul.f32.gmra.mxu0 %v1139
      %v1203 = vpop.f32.mrf.mxu0
      %v1204 = vadd.f32 %v246, %v1203
      %1205 = vdwg.mxu0
      %1222 = vrot.lane.b32.xlu0 %v1159, 4
      %v1223 = vpop.permute.xlu0 %1222
      %1224 = vrot.lane.b32.xlu0 %v1162, 4
      %v1225 = vpop.permute.xlu0 %1224
      %1226 = vrot.lane.b32.xlu0 %v1165, 4
      %v1227 = vpop.permute.xlu0 %1226
      %1228 = vrot.lane.b32.xlu0 %v1168, 4
      %v1229 = vpop.permute.xlu0 %1228
      %1230 = vrot.lane.b32.xlu0 %v1171, 4
      %v1231 = vpop.permute.xlu0 %1230
      %1232 = vrot.lane.b32.xlu0 %v1174, 4
      %v1233 = vpop.permute.xlu0 %1232
      %1234 = vrot.lane.b32.xlu0 %v1177, 4
      %v1235 = vpop.permute.xlu0 %1234
      %1236 = vrot.lane.b32.xlu0 %v1180, 4
      %v1237 = vpop.permute.xlu0 %1236
      %1238 = vrot.lane.b32.xlu0 %v1183, 4
      %v1239 = vpop.permute.xlu0 %1238
      %1240 = vrot.lane.b32.xlu0 %v1186, 4
      %v1241 = vpop.permute.xlu0 %1240
      %1242 = vrot.lane.b32.xlu0 %v1189, 4
      %v1243 = vpop.permute.xlu0 %1242
      %1244 = vrot.lane.b32.xlu0 %v1192, 4
      %v1245 = vpop.permute.xlu0 %1244
      %1246 = vrot.lane.b32.xlu0 %v1195, 4
      %v1247 = vpop.permute.xlu0 %1246
      %1248 = vrot.lane.b32.xlu0 %v1198, 4
      %v1249 = vpop.permute.xlu0 %1248
      %1250 = vrot.lane.b32.xlu0 %v1201, 4
      %v1251 = vpop.permute.xlu0 %1250
      %1252 = vrot.lane.b32.xlu0 %v1204, 4
      %v1253 = vpop.permute.xlu0 %1252
      %vm1270 = vcmask 39968
      %1271 = vst.msk [vmem:[#allocation2] sm:$0xff] %vm1270, %v1223
      %1272 = vst.msk [vmem:[#allocation2 + $0x8] sm:$0xff] %vm1270, %v1225
      %1273 = vst.msk [vmem:[#allocation2 + $0x10] sm:$0xff] %vm1270, %v1227
      %1274 = vst.msk [vmem:[#allocation2 + $0x18] sm:$0xff] %vm1270, %v1229
      %1275 = vst.msk [vmem:[#allocation2 + $0x20] sm:$0xff] %vm1270, %v1231
      %1276 = vst.msk [vmem:[#allocation2 + $0x28] sm:$0xff] %vm1270, %v1233
      %1277 = vst.msk [vmem:[#allocation2 + $0x30] sm:$0xff] %vm1270, %v1235
      %1278 = vst.msk [vmem:[#allocation2 + $0x38] sm:$0xff] %vm1270, %v1237
      %1279 = vst.msk [vmem:[#allocation2 + $0x40] sm:$0xff] %vm1270, %v1239
      %1280 = vst.msk [vmem:[#allocation2 + $0x48] sm:$0xff] %vm1270, %v1241
      %1281 = vst.msk [vmem:[#allocation2 + $0x50] sm:$0xff] %vm1270, %v1243
      %1282 = vst.msk [vmem:[#allocation2 + $0x58] sm:$0xff] %vm1270, %v1245
      %1283 = vst.msk [vmem:[#allocation2 + $0x60] sm:$0xff] %vm1270, %v1247
      %1284 = vst.msk [vmem:[#allocation2 + $0x68] sm:$0xff] %vm1270, %v1249
      %1285 = vst.msk [vmem:[#allocation2 + $0x70] sm:$0xff] %vm1270, %v1251
      %1286 = vst.msk [vmem:[#allocation2 + $0x78] sm:$0xff] %vm1270, %v1253
      %v1287 = vperm.slane %v205, 5
      %v1288 = vadd.f32 %v130, %v1287
      %v1289 = vadd.f32 %v133, %v1287
      %v1290 = vadd.f32 %v136, %v1287
      %v1291 = vadd.f32 %v139, %v1287
      %v1292 = vadd.f32 %v142, %v1287
      %v1293 = vadd.f32 %v145, %v1287
      %v1294 = vadd.f32 %v148, %v1287
      %v1295 = vadd.f32 %v151, %v1287
      %v1296 = vadd.f32 %v154, %v1287
      %v1297 = vadd.f32 %v157, %v1287
      %v1298 = vadd.f32 %v160, %v1287
      %v1299 = vadd.f32 %v163, %v1287
      %v1300 = vadd.f32 %v166, %v1287
      %v1301 = vadd.f32 %v169, %v1287
      %v1302 = vadd.f32 %v172, %v1287
      %v1303 = vadd.f32 %v175, %v1287
      %v1304 = vmax.f32 %v1288, 0.0
      %v1305 = vmax.f32 %v1289, 0.0
      %v1306 = vmax.f32 %v1290, 0.0
      %v1307 = vmax.f32 %v1291, 0.0
      %v1308 = vmax.f32 %v1292, 0.0
      %v1309 = vmax.f32 %v1293, 0.0
      %v1310 = vmax.f32 %v1294, 0.0
      %v1311 = vmax.f32 %v1295, 0.0
      %v1312 = vmax.f32 %v1296, 0.0
      %v1313 = vmax.f32 %v1297, 0.0
      %v1314 = vmax.f32 %v1298, 0.0
      %v1315 = vmax.f32 %v1299, 0.0
      %v1316 = vmax.f32 %v1300, 0.0
      %v1317 = vmax.f32 %v1301, 0.0
      %v1318 = vmax.f32 %v1302, 0.0
      %v1319 = vmax.f32 %v1303, 0.0
      %v1321 = vsel %vm248, %v1304, 0
      %v1324 = vsel %vm248, %v1305, 0
      %v1327 = vsel %vm248, %v1306, 0
      %v1330 = vsel %vm248, %v1307, 0
      %v1333 = vsel %vm248, %v1308, 0
      %v1336 = vsel %vm248, %v1309, 0
      %v1339 = vsel %vm248, %v1310, 0
      %v1342 = vsel %vm248, %v1311, 0
      %v1345 = vsel %vm248, %v1312, 0
      %v1348 = vsel %vm248, %v1313, 0
      %v1351 = vsel %vm248, %v1314, 0
      %v1354 = vsel %vm248, %v1315, 0
      %v1357 = vsel %vm248, %v1316, 0
      %v1360 = vsel %vm248, %v1317, 0
      %v1363 = vsel %vm248, %v1318, 0
      %v1366 = vsel %vm248, %v1319, 0
      %1368 = vmatpush.msra.mxu0 0.0
      %1369 = vmatpush.msra.mxu0 0.0
      %1370 = vmatpush.msra.mxu0 0.0
      %1371 = vmatpush.msra.mxu0 0.0
      %1372 = vmatpush.msra.mxu0 0.0
      %1373 = vmatpush.msra.mxu0 0.0
      %1374 = vmatpush.msra.mxu0 0.0
      %1375 = vmatpush.msra.mxu0 0.0
      %1376 = vmatpush.msra.mxu0 0.0
      %1377 = vmatpush.msra.mxu0 0.0
      %1378 = vmatpush.msra.mxu0 0.0
      %1379 = vmatpush.msra.mxu0 0.0
      %1380 = vmatpush.msra.mxu0 %v210
      %1381 = vmatpush.msra.mxu0 %v209
      %1382 = vmatpush.msra.mxu0 %v208
      %1383 = vmatpush.msra.mxu0 %v207
      %1384 = vmatmul.f32.gmra.mxu0 %v1321
      %v1385 = vpop.f32.mrf.mxu0
      %v1386 = vadd.f32 %v246, %v1385
      %1387 = vmatmul.f32.gmra.mxu0 %v1324
      %v1388 = vpop.f32.mrf.mxu0
      %v1389 = vadd.f32 %v246, %v1388
      %1390 = vmatmul.f32.gmra.mxu0 %v1327
      %v1391 = vpop.f32.mrf.mxu0
      %v1392 = vadd.f32 %v246, %v1391
      %1393 = vmatmul.f32.gmra.mxu0 %v1330
      %v1394 = vpop.f32.mrf.mxu0
      %v1395 = vadd.f32 %v246, %v1394
      %1396 = vmatmul.f32.gmra.mxu0 %v1333
      %v1397 = vpop.f32.mrf.mxu0
      %v1398 = vadd.f32 %v246, %v1397
      %1399 = vmatmul.f32.gmra.mxu0 %v1336
      %v1400 = vpop.f32.mrf.mxu0
      %v1401 = vadd.f32 %v246, %v1400
      %1402 = vmatmul.f32.gmra.mxu0 %v1339
      %v1403 = vpop.f32.mrf.mxu0
      %v1404 = vadd.f32 %v246, %v1403
      %1405 = vmatmul.f32.gmra.mxu0 %v1342
      %v1406 = vpop.f32.mrf.mxu0
      %v1407 = vadd.f32 %v246, %v1406
      %1408 = vmatmul.f32.gmra.mxu0 %v1345
      %v1409 = vpop.f32.mrf.mxu0
      %v1410 = vadd.f32 %v246, %v1409
      %1411 = vmatmul.f32.gmra.mxu0 %v1348
      %v1412 = vpop.f32.mrf.mxu0
      %v1413 = vadd.f32 %v246, %v1412
      %1414 = vmatmul.f32.gmra.mxu0 %v1351
      %v1415 = vpop.f32.mrf.mxu0
      %v1416 = vadd.f32 %v246, %v1415
      %1417 = vmatmul.f32.gmra.mxu0 %v1354
      %v1418 = vpop.f32.mrf.mxu0
      %v1419 = vadd.f32 %v246, %v1418
      %1420 = vmatmul.f32.gmra.mxu0 %v1357
      %v1421 = vpop.f32.mrf.mxu0
      %v1422 = vadd.f32 %v246, %v1421
      %1423 = vmatmul.f32.gmra.mxu0 %v1360
      %v1424 = vpop.f32.mrf.mxu0
      %v1425 = vadd.f32 %v246, %v1424
      %1426 = vmatmul.f32.gmra.mxu0 %v1363
      %v1427 = vpop.f32.mrf.mxu0
      %v1428 = vadd.f32 %v246, %v1427
      %1429 = vmatmul.f32.gmra.mxu0 %v1366
      %v1430 = vpop.f32.mrf.mxu0
      %v1431 = vadd.f32 %v246, %v1430
      %1432 = vdwg.mxu0
      %1449 = vrot.lane.b32.xlu0 %v1386, 5
      %v1450 = vpop.permute.xlu0 %1449
      %1451 = vrot.lane.b32.xlu0 %v1389, 5
      %v1452 = vpop.permute.xlu0 %1451
      %1453 = vrot.lane.b32.xlu0 %v1392, 5
      %v1454 = vpop.permute.xlu0 %1453
      %1455 = vrot.lane.b32.xlu0 %v1395, 5
      %v1456 = vpop.permute.xlu0 %1455
      %1457 = vrot.lane.b32.xlu0 %v1398, 5
      %v1458 = vpop.permute.xlu0 %1457
      %1459 = vrot.lane.b32.xlu0 %v1401, 5
      %v1460 = vpop.permute.xlu0 %1459
      %1461 = vrot.lane.b32.xlu0 %v1404, 5
      %v1462 = vpop.permute.xlu0 %1461
      %1463 = vrot.lane.b32.xlu0 %v1407, 5
      %v1464 = vpop.permute.xlu0 %1463
      %1465 = vrot.lane.b32.xlu0 %v1410, 5
      %v1466 = vpop.permute.xlu0 %1465
      %1467 = vrot.lane.b32.xlu0 %v1413, 5
      %v1468 = vpop.permute.xlu0 %1467
      %1469 = vrot.lane.b32.xlu0 %v1416, 5
      %v1470 = vpop.permute.xlu0 %1469
      %1471 = vrot.lane.b32.xlu0 %v1419, 5
      %v1472 = vpop.permute.xlu0 %1471
      %1473 = vrot.lane.b32.xlu0 %v1422, 5
      %v1474 = vpop.permute.xlu0 %1473
      %1475 = vrot.lane.b32.xlu0 %v1425, 5
      %v1476 = vpop.permute.xlu0 %1475
      %1477 = vrot.lane.b32.xlu0 %v1428, 5
      %v1478 = vpop.permute.xlu0 %1477
      %1479 = vrot.lane.b32.xlu0 %v1431, 5
      %v1480 = vpop.permute.xlu0 %1479
      %vm1497 = vcmask 48168
      %1498 = vst.msk [vmem:[#allocation2] sm:$0xff] %vm1497, %v1450
      %1499 = vst.msk [vmem:[#allocation2 + $0x8] sm:$0xff] %vm1497, %v1452
      %1500 = vst.msk [vmem:[#allocation2 + $0x10] sm:$0xff] %vm1497, %v1454
      %1501 = vst.msk [vmem:[#allocation2 + $0x18] sm:$0xff] %vm1497, %v1456
      %1502 = vst.msk [vmem:[#allocation2 + $0x20] sm:$0xff] %vm1497, %v1458
      %1503 = vst.msk [vmem:[#allocation2 + $0x28] sm:$0xff] %vm1497, %v1460
      %1504 = vst.msk [vmem:[#allocation2 + $0x30] sm:$0xff] %vm1497, %v1462
      %1505 = vst.msk [vmem:[#allocation2 + $0x38] sm:$0xff] %vm1497, %v1464
      %1506 = vst.msk [vmem:[#allocation2 + $0x40] sm:$0xff] %vm1497, %v1466
      %1507 = vst.msk [vmem:[#allocation2 + $0x48] sm:$0xff] %vm1497, %v1468
      %1508 = vst.msk [vmem:[#allocation2 + $0x50] sm:$0xff] %vm1497, %v1470
      %1509 = vst.msk [vmem:[#allocation2 + $0x58] sm:$0xff] %vm1497, %v1472
      %1510 = vst.msk [vmem:[#allocation2 + $0x60] sm:$0xff] %vm1497, %v1474
      %1511 = vst.msk [vmem:[#allocation2 + $0x68] sm:$0xff] %vm1497, %v1476
      %1512 = vst.msk [vmem:[#allocation2 + $0x70] sm:$0xff] %vm1497, %v1478
      %1513 = vst.msk [vmem:[#allocation2 + $0x78] sm:$0xff] %vm1497, %v1480
      %v1514 = vperm.slane %v205, 6
      %v1515 = vadd.f32 %v130, %v1514
      %v1516 = vadd.f32 %v133, %v1514
      %v1517 = vadd.f32 %v136, %v1514
      %v1518 = vadd.f32 %v139, %v1514
      %v1519 = vadd.f32 %v142, %v1514
      %v1520 = vadd.f32 %v145, %v1514
      %v1521 = vadd.f32 %v148, %v1514
      %v1522 = vadd.f32 %v151, %v1514
      %v1523 = vadd.f32 %v154, %v1514
      %v1524 = vadd.f32 %v157, %v1514
      %v1525 = vadd.f32 %v160, %v1514
      %v1526 = vadd.f32 %v163, %v1514
      %v1527 = vadd.f32 %v166, %v1514
      %v1528 = vadd.f32 %v169, %v1514
      %v1529 = vadd.f32 %v172, %v1514
      %v1530 = vadd.f32 %v175, %v1514
      %v1531 = vmax.f32 %v1515, 0.0
      %v1532 = vmax.f32 %v1516, 0.0
      %v1533 = vmax.f32 %v1517, 0.0
      %v1534 = vmax.f32 %v1518, 0.0
      %v1535 = vmax.f32 %v1519, 0.0
      %v1536 = vmax.f32 %v1520, 0.0
      %v1537 = vmax.f32 %v1521, 0.0
      %v1538 = vmax.f32 %v1522, 0.0
      %v1539 = vmax.f32 %v1523, 0.0
      %v1540 = vmax.f32 %v1524, 0.0
      %v1541 = vmax.f32 %v1525, 0.0
      %v1542 = vmax.f32 %v1526, 0.0
      %v1543 = vmax.f32 %v1527, 0.0
      %v1544 = vmax.f32 %v1528, 0.0
      %v1545 = vmax.f32 %v1529, 0.0
      %v1546 = vmax.f32 %v1530, 0.0
      %v1548 = vsel %vm248, %v1531, 0
      %v1551 = vsel %vm248, %v1532, 0
      %v1554 = vsel %vm248, %v1533, 0
      %v1557 = vsel %vm248, %v1534, 0
      %v1560 = vsel %vm248, %v1535, 0
      %v1563 = vsel %vm248, %v1536, 0
      %v1566 = vsel %vm248, %v1537, 0
      %v1569 = vsel %vm248, %v1538, 0
      %v1572 = vsel %vm248, %v1539, 0
      %v1575 = vsel %vm248, %v1540, 0
      %v1578 = vsel %vm248, %v1541, 0
      %v1581 = vsel %vm248, %v1542, 0
      %v1584 = vsel %vm248, %v1543, 0
      %v1587 = vsel %vm248, %v1544, 0
      %v1590 = vsel %vm248, %v1545, 0
      %v1593 = vsel %vm248, %v1546, 0
      %1595 = vmatpush.msra.mxu0 0.0
      %1596 = vmatpush.msra.mxu0 0.0
      %1597 = vmatpush.msra.mxu0 0.0
      %1598 = vmatpush.msra.mxu0 0.0
      %1599 = vmatpush.msra.mxu0 0.0
      %1600 = vmatpush.msra.mxu0 0.0
      %1601 = vmatpush.msra.mxu0 0.0
      %1602 = vmatpush.msra.mxu0 0.0
      %1603 = vmatpush.msra.mxu0 0.0
      %1604 = vmatpush.msra.mxu0 0.0
      %1605 = vmatpush.msra.mxu0 0.0
      %1606 = vmatpush.msra.mxu0 0.0
      %1607 = vmatpush.msra.mxu0 %v210
      %1608 = vmatpush.msra.mxu0 %v209
      %1609 = vmatpush.msra.mxu0 %v208
      %1610 = vmatpush.msra.mxu0 %v207
      %1611 = vmatmul.f32.gmra.mxu0 %v1548
      %v1612 = vpop.f32.mrf.mxu0
      %v1613 = vadd.f32 %v246, %v1612
      %1614 = vmatmul.f32.gmra.mxu0 %v1551
      %v1615 = vpop.f32.mrf.mxu0
      %v1616 = vadd.f32 %v246, %v1615
      %1617 = vmatmul.f32.gmra.mxu0 %v1554
      %v1618 = vpop.f32.mrf.mxu0
      %v1619 = vadd.f32 %v246, %v1618
      %1620 = vmatmul.f32.gmra.mxu0 %v1557
      %v1621 = vpop.f32.mrf.mxu0
      %v1622 = vadd.f32 %v246, %v1621
      %1623 = vmatmul.f32.gmra.mxu0 %v1560
      %v1624 = vpop.f32.mrf.mxu0
      %v1625 = vadd.f32 %v246, %v1624
      %1626 = vmatmul.f32.gmra.mxu0 %v1563
      %v1627 = vpop.f32.mrf.mxu0
      %v1628 = vadd.f32 %v246, %v1627
      %1629 = vmatmul.f32.gmra.mxu0 %v1566
      %v1630 = vpop.f32.mrf.mxu0
      %v1631 = vadd.f32 %v246, %v1630
      %1632 = vmatmul.f32.gmra.mxu0 %v1569
      %v1633 = vpop.f32.mrf.mxu0
      %v1634 = vadd.f32 %v246, %v1633
      %1635 = vmatmul.f32.gmra.mxu0 %v1572
      %v1636 = vpop.f32.mrf.mxu0
      %v1637 = vadd.f32 %v246, %v1636
      %1638 = vmatmul.f32.gmra.mxu0 %v1575
      %v1639 = vpop.f32.mrf.mxu0
      %v1640 = vadd.f32 %v246, %v1639
      %1641 = vmatmul.f32.gmra.mxu0 %v1578
      %v1642 = vpop.f32.mrf.mxu0
      %v1643 = vadd.f32 %v246, %v1642
      %1644 = vmatmul.f32.gmra.mxu0 %v1581
      %v1645 = vpop.f32.mrf.mxu0
      %v1646 = vadd.f32 %v246, %v1645
      %1647 = vmatmul.f32.gmra.mxu0 %v1584
      %v1648 = vpop.f32.mrf.mxu0
      %v1649 = vadd.f32 %v246, %v1648
      %1650 = vmatmul.f32.gmra.mxu0 %v1587
      %v1651 = vpop.f32.mrf.mxu0
      %v1652 = vadd.f32 %v246, %v1651
      %1653 = vmatmul.f32.gmra.mxu0 %v1590
      %v1654 = vpop.f32.mrf.mxu0
      %v1655 = vadd.f32 %v246, %v1654
      %1656 = vmatmul.f32.gmra.mxu0 %v1593
      %v1657 = vpop.f32.mrf.mxu0
      %v1658 = vadd.f32 %v246, %v1657
      %1659 = vdwg.mxu0
      %1676 = vrot.lane.b32.xlu0 %v1613, 6
      %v1677 = vpop.permute.xlu0 %1676
      %1678 = vrot.lane.b32.xlu0 %v1616, 6
      %v1679 = vpop.permute.xlu0 %1678
      %1680 = vrot.lane.b32.xlu0 %v1619, 6
      %v1681 = vpop.permute.xlu0 %1680
      %1682 = vrot.lane.b32.xlu0 %v1622, 6
      %v1683 = vpop.permute.xlu0 %1682
      %1684 = vrot.lane.b32.xlu0 %v1625, 6
      %v1685 = vpop.permute.xlu0 %1684
      %1686 = vrot.lane.b32.xlu0 %v1628, 6
      %v1687 = vpop.permute.xlu0 %1686
      %1688 = vrot.lane.b32.xlu0 %v1631, 6
      %v1689 = vpop.permute.xlu0 %1688
      %1690 = vrot.lane.b32.xlu0 %v1634, 6
      %v1691 = vpop.permute.xlu0 %1690
      %1692 = vrot.lane.b32.xlu0 %v1637, 6
      %v1693 = vpop.permute.xlu0 %1692
      %1694 = vrot.lane.b32.xlu0 %v1640, 6
      %v1695 = vpop.permute.xlu0 %1694
      %1696 = vrot.lane.b32.xlu0 %v1643, 6
      %v1697 = vpop.permute.xlu0 %1696
      %1698 = vrot.lane.b32.xlu0 %v1646, 6
      %v1699 = vpop.permute.xlu0 %1698
      %1700 = vrot.lane.b32.xlu0 %v1649, 6
      %v1701 = vpop.permute.xlu0 %1700
      %1702 = vrot.lane.b32.xlu0 %v1652, 6
      %v1703 = vpop.permute.xlu0 %1702
      %1704 = vrot.lane.b32.xlu0 %v1655, 6
      %v1705 = vpop.permute.xlu0 %1704
      %1706 = vrot.lane.b32.xlu0 %v1658, 6
      %v1707 = vpop.permute.xlu0 %1706
      %vm1724 = vcmask 56368
      %1725 = vst.msk [vmem:[#allocation2] sm:$0xff] %vm1724, %v1677
      %1726 = vst.msk [vmem:[#allocation2 + $0x8] sm:$0xff] %vm1724, %v1679
      %1727 = vst.msk [vmem:[#allocation2 + $0x10] sm:$0xff] %vm1724, %v1681
      %1728 = vst.msk [vmem:[#allocation2 + $0x18] sm:$0xff] %vm1724, %v1683
      %1729 = vst.msk [vmem:[#allocation2 + $0x20] sm:$0xff] %vm1724, %v1685
      %1730 = vst.msk [vmem:[#allocation2 + $0x28] sm:$0xff] %vm1724, %v1687
      %1731 = vst.msk [vmem:[#allocation2 + $0x30] sm:$0xff] %vm1724, %v1689
      %1732 = vst.msk [vmem:[#allocation2 + $0x38] sm:$0xff] %vm1724, %v1691
      %1733 = vst.msk [vmem:[#allocation2 + $0x40] sm:$0xff] %vm1724, %v1693
      %1734 = vst.msk [vmem:[#allocation2 + $0x48] sm:$0xff] %vm1724, %v1695
      %1735 = vst.msk [vmem:[#allocation2 + $0x50] sm:$0xff] %vm1724, %v1697
      %1736 = vst.msk [vmem:[#allocation2 + $0x58] sm:$0xff] %vm1724, %v1699
      %1737 = vst.msk [vmem:[#allocation2 + $0x60] sm:$0xff] %vm1724, %v1701
      %1738 = vst.msk [vmem:[#allocation2 + $0x68] sm:$0xff] %vm1724, %v1703
      %1739 = vst.msk [vmem:[#allocation2 + $0x70] sm:$0xff] %vm1724, %v1705
      %1740 = vst.msk [vmem:[#allocation2 + $0x78] sm:$0xff] %vm1724, %v1707
      %v1741 = vperm.slane %v205, 7
      %v1742 = vadd.f32 %v130, %v1741
      %v1743 = vadd.f32 %v133, %v1741
      %v1744 = vadd.f32 %v136, %v1741
      %v1745 = vadd.f32 %v139, %v1741
      %v1746 = vadd.f32 %v142, %v1741
      %v1747 = vadd.f32 %v145, %v1741
      %v1748 = vadd.f32 %v148, %v1741
      %v1749 = vadd.f32 %v151, %v1741
      %v1750 = vadd.f32 %v154, %v1741
      %v1751 = vadd.f32 %v157, %v1741
      %v1752 = vadd.f32 %v160, %v1741
      %v1753 = vadd.f32 %v163, %v1741
      %v1754 = vadd.f32 %v166, %v1741
      %v1755 = vadd.f32 %v169, %v1741
      %v1756 = vadd.f32 %v172, %v1741
      %v1757 = vadd.f32 %v175, %v1741
      %v1758 = vmax.f32 %v1742, 0.0
      %v1759 = vmax.f32 %v1743, 0.0
      %v1760 = vmax.f32 %v1744, 0.0
      %v1761 = vmax.f32 %v1745, 0.0
      %v1762 = vmax.f32 %v1746, 0.0
      %v1763 = vmax.f32 %v1747, 0.0
      %v1764 = vmax.f32 %v1748, 0.0
      %v1765 = vmax.f32 %v1749, 0.0
      %v1766 = vmax.f32 %v1750, 0.0
      %v1767 = vmax.f32 %v1751, 0.0
      %v1768 = vmax.f32 %v1752, 0.0
      %v1769 = vmax.f32 %v1753, 0.0
      %v1770 = vmax.f32 %v1754, 0.0
      %v1771 = vmax.f32 %v1755, 0.0
      %v1772 = vmax.f32 %v1756, 0.0
      %v1773 = vmax.f32 %v1757, 0.0
      %v1775 = vsel %vm248, %v1758, 0
      %v1778 = vsel %vm248, %v1759, 0
      %v1781 = vsel %vm248, %v1760, 0
      %v1784 = vsel %vm248, %v1761, 0
      %v1787 = vsel %vm248, %v1762, 0
      %v1790 = vsel %vm248, %v1763, 0
      %v1793 = vsel %vm248, %v1764, 0
      %v1796 = vsel %vm248, %v1765, 0
      %v1799 = vsel %vm248, %v1766, 0
      %v1802 = vsel %vm248, %v1767, 0
      %v1805 = vsel %vm248, %v1768, 0
      %v1808 = vsel %vm248, %v1769, 0
      %v1811 = vsel %vm248, %v1770, 0
      %v1814 = vsel %vm248, %v1771, 0
      %v1817 = vsel %vm248, %v1772, 0
      %v1820 = vsel %vm248, %v1773, 0
      %1822 = vmatpush.msra.mxu0 0.0
      %1823 = vmatpush.msra.mxu0 0.0
      %1824 = vmatpush.msra.mxu0 0.0
      %1825 = vmatpush.msra.mxu0 0.0
      %1826 = vmatpush.msra.mxu0 0.0
      %1827 = vmatpush.msra.mxu0 0.0
      %1828 = vmatpush.msra.mxu0 0.0
      %1829 = vmatpush.msra.mxu0 0.0
      %1830 = vmatpush.msra.mxu0 0.0
      %1831 = vmatpush.msra.mxu0 0.0
      %1832 = vmatpush.msra.mxu0 0.0
      %1833 = vmatpush.msra.mxu0 0.0
      %1834 = vmatpush.msra.mxu0 %v210
      %1835 = vmatpush.msra.mxu0 %v209
      %1836 = vmatpush.msra.mxu0 %v208
      %1837 = vmatpush.msra.mxu0 %v207
      %1838 = vmatmul.f32.gmra.mxu0 %v1775
      %v1839 = vpop.f32.mrf.mxu0
      %v1840 = vadd.f32 %v246, %v1839
      %1841 = vmatmul.f32.gmra.mxu0 %v1778
      %v1842 = vpop.f32.mrf.mxu0
      %v1843 = vadd.f32 %v246, %v1842
      %1844 = vmatmul.f32.gmra.mxu0 %v1781
      %v1845 = vpop.f32.mrf.mxu0
      %v1846 = vadd.f32 %v246, %v1845
      %1847 = vmatmul.f32.gmra.mxu0 %v1784
      %v1848 = vpop.f32.mrf.mxu0
      %v1849 = vadd.f32 %v246, %v1848
      %1850 = vmatmul.f32.gmra.mxu0 %v1787
      %v1851 = vpop.f32.mrf.mxu0
      %v1852 = vadd.f32 %v246, %v1851
      %1853 = vmatmul.f32.gmra.mxu0 %v1790
      %v1854 = vpop.f32.mrf.mxu0
      %v1855 = vadd.f32 %v246, %v1854
      %1856 = vmatmul.f32.gmra.mxu0 %v1793
      %v1857 = vpop.f32.mrf.mxu0
      %v1858 = vadd.f32 %v246, %v1857
      %1859 = vmatmul.f32.gmra.mxu0 %v1796
      %v1860 = vpop.f32.mrf.mxu0
      %v1861 = vadd.f32 %v246, %v1860
      %1862 = vmatmul.f32.gmra.mxu0 %v1799
      %v1863 = vpop.f32.mrf.mxu0
      %v1864 = vadd.f32 %v246, %v1863
      %1865 = vmatmul.f32.gmra.mxu0 %v1802
      %v1866 = vpop.f32.mrf.mxu0
      %v1867 = vadd.f32 %v246, %v1866
      %1868 = vmatmul.f32.gmra.mxu0 %v1805
      %v1869 = vpop.f32.mrf.mxu0
      %v1870 = vadd.f32 %v246, %v1869
      %1871 = vmatmul.f32.gmra.mxu0 %v1808
      %v1872 = vpop.f32.mrf.mxu0
      %v1873 = vadd.f32 %v246, %v1872
      %1874 = vmatmul.f32.gmra.mxu0 %v1811
      %v1875 = vpop.f32.mrf.mxu0
      %v1876 = vadd.f32 %v246, %v1875
      %1877 = vmatmul.f32.gmra.mxu0 %v1814
      %v1878 = vpop.f32.mrf.mxu0
      %v1879 = vadd.f32 %v246, %v1878
      %1880 = vmatmul.f32.gmra.mxu0 %v1817
      %v1881 = vpop.f32.mrf.mxu0
      %v1882 = vadd.f32 %v246, %v1881
      %1883 = vmatmul.f32.gmra.mxu0 %v1820
      %v1884 = vpop.f32.mrf.mxu0
      %v1885 = vadd.f32 %v246, %v1884
      %1886 = vdwg.mxu0
      %1903 = vrot.lane.b32.xlu0 %v1840, 7
      %v1904 = vpop.permute.xlu0 %1903
      %1905 = vrot.lane.b32.xlu0 %v1843, 7
      %v1906 = vpop.permute.xlu0 %1905
      %1907 = vrot.lane.b32.xlu0 %v1846, 7
      %v1908 = vpop.permute.xlu0 %1907
      %1909 = vrot.lane.b32.xlu0 %v1849, 7
      %v1910 = vpop.permute.xlu0 %1909
      %1911 = vrot.lane.b32.xlu0 %v1852, 7
      %v1912 = vpop.permute.xlu0 %1911
      %1913 = vrot.lane.b32.xlu0 %v1855, 7
      %v1914 = vpop.permute.xlu0 %1913
      %1915 = vrot.lane.b32.xlu0 %v1858, 7
      %v1916 = vpop.permute.xlu0 %1915
      %1917 = vrot.lane.b32.xlu0 %v1861, 7
      %v1918 = vpop.permute.xlu0 %1917
      %1919 = vrot.lane.b32.xlu0 %v1864, 7
      %v1920 = vpop.permute.xlu0 %1919
      %1921 = vrot.lane.b32.xlu0 %v1867, 7
      %v1922 = vpop.permute.xlu0 %1921
      %1923 = vrot.lane.b32.xlu0 %v1870, 7
      %v1924 = vpop.permute.xlu0 %1923
      %1925 = vrot.lane.b32.xlu0 %v1873, 7
      %v1926 = vpop.permute.xlu0 %1925
      %1927 = vrot.lane.b32.xlu0 %v1876, 7
      %v1928 = vpop.permute.xlu0 %1927
      %1929 = vrot.lane.b32.xlu0 %v1879, 7
      %v1930 = vpop.permute.xlu0 %1929
      %1931 = vrot.lane.b32.xlu0 %v1882, 7
      %v1932 = vpop.permute.xlu0 %1931
      %1933 = vrot.lane.b32.xlu0 %v1885, 7
      %v1934 = vpop.permute.xlu0 %1933
      %vm1951 = vcmask 64568
      %1952 = vst.msk [vmem:[#allocation2] sm:$0xff] %vm1951, %v1904
      %1953 = vst.msk [vmem:[#allocation2 + $0x8] sm:$0xff] %vm1951, %v1906
      %1954 = vst.msk [vmem:[#allocation2 + $0x10] sm:$0xff] %vm1951, %v1908
      %1955 = vst.msk [vmem:[#allocation2 + $0x18] sm:$0xff] %vm1951, %v1910
      %1956 = vst.msk [vmem:[#allocation2 + $0x20] sm:$0xff] %vm1951, %v1912
      %1957 = vst.msk [vmem:[#allocation2 + $0x28] sm:$0xff] %vm1951, %v1914
      %1958 = vst.msk [vmem:[#allocation2 + $0x30] sm:$0xff] %vm1951, %v1916
      %1959 = vst.msk [vmem:[#allocation2 + $0x38] sm:$0xff] %vm1951, %v1918
      %1960 = vst.msk [vmem:[#allocation2 + $0x40] sm:$0xff] %vm1951, %v1920
      %1961 = vst.msk [vmem:[#allocation2 + $0x48] sm:$0xff] %vm1951, %v1922
      %1962 = vst.msk [vmem:[#allocation2 + $0x50] sm:$0xff] %vm1951, %v1924
      %1963 = vst.msk [vmem:[#allocation2 + $0x58] sm:$0xff] %vm1951, %v1926
      %1964 = vst.msk [vmem:[#allocation2 + $0x60] sm:$0xff] %vm1951, %v1928
      %1965 = vst.msk [vmem:[#allocation2 + $0x68] sm:$0xff] %vm1951, %v1930
      %1966 = vst.msk [vmem:[#allocation2 + $0x70] sm:$0xff] %vm1951, %v1932
      %1967 = vst.msk [vmem:[#allocation2 + $0x78] sm:$0xff] %vm1951, %v1934
      %v1968 = vld [vmem:[#allocation2] sm:$0xff]
      %v1969 = vld [vmem:[#allocation2 + $0x8] sm:$0xff]
      %v1970 = vld [vmem:[#allocation2 + $0x10] sm:$0xff]
      %v1971 = vld [vmem:[#allocation2 + $0x18] sm:$0xff]
      %v1972 = vld [vmem:[#allocation2 + $0x20] sm:$0xff]
      %v1973 = vld [vmem:[#allocation2 + $0x28] sm:$0xff]
      %v1974 = vld [vmem:[#allocation2 + $0x30] sm:$0xff]
      %v1975 = vld [vmem:[#allocation2 + $0x38] sm:$0xff]
      %v1976 = vld [vmem:[#allocation2 + $0x40] sm:$0xff]
      %v1977 = vld [vmem:[#allocation2 + $0x48] sm:$0xff]
      %v1978 = vld [vmem:[#allocation2 + $0x50] sm:$0xff]
      %v1979 = vld [vmem:[#allocation2 + $0x58] sm:$0xff]
      %v1980 = vld [vmem:[#allocation2 + $0x60] sm:$0xff]
      %v1981 = vld [vmem:[#allocation2 + $0x68] sm:$0xff]
      %v1982 = vld [vmem:[#allocation2 + $0x70] sm:$0xff]
      %v1983 = vld [vmem:[#allocation2 + $0x78] sm:$0xff]
      %v1984 = vld [vmem:[%s7] sm:$0xff]
      %1985 = vmatpush.msra.mxu0 %v1983
      %1986 = vmatpush.msra.mxu0 %v1982
      %1987 = vmatpush.msra.mxu0 %v1981
      %1988 = vmatpush.msra.mxu0 %v1980
      %1989 = vmatpush.msra.mxu0 %v1979
      %1990 = vmatpush.msra.mxu0 %v1978
      %1991 = vmatpush.msra.mxu0 %v1977
      %1992 = vmatpush.msra.mxu0 %v1976
      %1993 = vmatpush.msra.mxu0 %v1975
      %1994 = vmatpush.msra.mxu0 %v1974
      %1995 = vmatpush.msra.mxu0 %v1973
      %1996 = vmatpush.msra.mxu0 %v1972
      %1997 = vmatpush.msra.mxu0 %v1971
      %1998 = vmatpush.msra.mxu0 %v1970
      %1999 = vmatpush.msra.mxu0 %v1969
      %2000 = vmatpush.msra.mxu0 %v1968
      %2001 = vmatmul.f32.gmra.mxu0 %v1984
      %v2002 = vpop.f32.mrf.mxu0
      %v2003 = vadd.f32 0.0, %v2002
      %2004 = vdwg.mxu0
      %2005 = vst.msk [vmem:[#allocation5] sm:$0xff] %vm63, %v2003
      %v2006 = vsel %vm63, %v1968, -inf
      %v2007 = vsel %vm63, %v1969, -inf
      %v2008 = vsel %vm63, %v1970, -inf
      %v2009 = vsel %vm63, %v1971, -inf
      %v2010 = vsel %vm63, %v1972, -inf
      %v2011 = vmax.f32 %v2006, %v2010
      %v2012 = vsel %vm63, %v1973, -inf
      %v2013 = vmax.f32 %v2007, %v2012
      %v2014 = vsel %vm63, %v1974, -inf
      %v2015 = vmax.f32 %v2008, %v2014
      %v2016 = vsel %vm63, %v1975, -inf
      %v2017 = vmax.f32 %v2009, %v2016
      %v2018 = vsel %vm63, %v1976, -inf
      %v2019 = vmax.f32 %v2011, %v2018
      %v2020 = vsel %vm63, %v1977, -inf
      %v2021 = vmax.f32 %v2013, %v2020
      %v2022 = vsel %vm63, %v1978, -inf
      %v2023 = vmax.f32 %v2015, %v2022
      %v2024 = vsel %vm63, %v1979, -inf
      %v2025 = vmax.f32 %v2017, %v2024
      %v2026 = vsel %vm63, %v1980, -inf
      %v2027 = vmax.f32 %v2019, %v2026
      %v2028 = vsel %vm63, %v1981, -inf
      %v2029 = vmax.f32 %v2021, %v2028
      %v2030 = vsel %vm63, %v1982, -inf
      %v2031 = vmax.f32 %v2023, %v2030
      %v2032 = vsel %vm63, %v1983, -inf
      %v2033 = vmax.f32 %v2025, %v2032
      %v2034 = vmax.f32 %v2027, %v2029
      %v2035 = vmax.f32 %v2031, %v2033
      %v2036 = vmax.f32 %v2034, %v2035
      %v2037 = vrot.slane %v2036, 4
      %v2038 = vmax.f32 %v2036, %v2037
      %v2039 = vrot.slane %v2038, 2
      %v2040 = vmax.f32 %v2038, %v2039
      %v2041 = vrot.slane %v2040, 1
      %v2042 = vmax.f32 %v2040, %v2041
      %v2043 = vsel %vm63, %v2042, -inf
      %2044 = vmax.xlane.f32.xlu0 %v2043
      %v2045 = vpop.xlane.xlu0 %2044
      %vm2046 = vcmask 0
      %2047 = vst.msk [vmem:[#allocation3] sm:$0x1] %vm2046, %v2045
      %v2048 = vsub.f32 %v1968, %v2045
      %v2049 = vsub.f32 %v1969, %v2045
      %v2050 = vsub.f32 %v1970, %v2045
      %v2051 = vsub.f32 %v1971, %v2045
      %v2052 = vsub.f32 %v1972, %v2045
      %v2053 = vsub.f32 %v1973, %v2045
      %v2054 = vsub.f32 %v1974, %v2045
      %v2055 = vsub.f32 %v1975, %v2045
      %v2056 = vsub.f32 %v1976, %v2045
      %v2057 = vsub.f32 %v1977, %v2045
      %v2058 = vsub.f32 %v1978, %v2045
      %v2059 = vsub.f32 %v1979, %v2045
      %v2060 = vsub.f32 %v1980, %v2045
      %v2061 = vsub.f32 %v1981, %v2045
      %v2062 = vsub.f32 %v1982, %v2045
      %v2063 = vsub.f32 %v1983, %v2045
      %v2064 = vmul.f32 %v2048, 1.442695
      %v2065 = vpow.pop %v2064
      %v2066 = vmul.f32 %v2049, 1.442695
      %v2067 = vpow.pop %v2066
      %v2068 = vmul.f32 %v2050, 1.442695
      %v2069 = vpow.pop %v2068
      %v2070 = vmul.f32 %v2051, 1.442695
      %v2071 = vpow.pop %v2070
      %v2072 = vmul.f32 %v2052, 1.442695
      %v2073 = vpow.pop %v2072
      %v2074 = vmul.f32 %v2053, 1.442695
      %v2075 = vpow.pop %v2074
      %v2076 = vmul.f32 %v2054, 1.442695
      %v2077 = vpow.pop %v2076
      %v2078 = vmul.f32 %v2055, 1.442695
      %v2079 = vpow.pop %v2078
      %v2080 = vmul.f32 %v2056, 1.442695
      %v2081 = vpow.pop %v2080
      %v2082 = vmul.f32 %v2057, 1.442695
      %v2083 = vpow.pop %v2082
      %v2084 = vmul.f32 %v2058, 1.442695
      %v2085 = vpow.pop %v2084
      %v2086 = vmul.f32 %v2059, 1.442695
      %v2087 = vpow.pop %v2086
      %v2088 = vmul.f32 %v2060, 1.442695
      %v2089 = vpow.pop %v2088
      %v2090 = vmul.f32 %v2061, 1.442695
      %v2091 = vpow.pop %v2090
      %v2092 = vmul.f32 %v2062, 1.442695
      %v2093 = vpow.pop %v2092
      %v2094 = vmul.f32 %v2063, 1.442695
      %v2095 = vpow.pop %v2094
      %2096 = vst.msk [vmem:[#allocation2] sm:$0xff] %vm63, %v2065
      %2097 = vst.msk [vmem:[#allocation2 + $0x8] sm:$0xff] %vm63, %v2067
      %2098 = vst.msk [vmem:[#allocation2 + $0x10] sm:$0xff] %vm63, %v2069
      %2099 = vst.msk [vmem:[#allocation2 + $0x18] sm:$0xff] %vm63, %v2071
      %2100 = vst.msk [vmem:[#allocation2 + $0x20] sm:$0xff] %vm63, %v2073
      %2101 = vst.msk [vmem:[#allocation2 + $0x28] sm:$0xff] %vm63, %v2075
      %2102 = vst.msk [vmem:[#allocation2 + $0x30] sm:$0xff] %vm63, %v2077
      %2103 = vst.msk [vmem:[#allocation2 + $0x38] sm:$0xff] %vm63, %v2079
      %2104 = vst.msk [vmem:[#allocation2 + $0x40] sm:$0xff] %vm63, %v2081
      %2105 = vst.msk [vmem:[#allocation2 + $0x48] sm:$0xff] %vm63, %v2083
      %2106 = vst.msk [vmem:[#allocation2 + $0x50] sm:$0xff] %vm63, %v2085
      %2107 = vst.msk [vmem:[#allocation2 + $0x58] sm:$0xff] %vm63, %v2087
      %2108 = vst.msk [vmem:[#allocation2 + $0x60] sm:$0xff] %vm63, %v2089
      %2109 = vst.msk [vmem:[#allocation2 + $0x68] sm:$0xff] %vm63, %v2091
      %2110 = vst.msk [vmem:[#allocation2 + $0x70] sm:$0xff] %vm63, %v2093
      %2111 = vst.msk [vmem:[#allocation2 + $0x78] sm:$0xff] %vm63, %v2095
    $region45: #{tpu_custom_call.1} parent=1 // pred_fallthru
      _
    %v2112 = vld [vmem:[%s8] sm:$0xf]
    %v2113 = vld [vmem:[%s8 + $0x4] sm:$0xf]
    %v2114 = vld [vmem:[%s8 + $0x8] sm:$0xf]
    %v2115 = vld [vmem:[%s8 + $0xc] sm:$0xf]
    %v2116 = vld [vmem:[%s8 + $0x10] sm:$0xf]
    %v2117 = vld [vmem:[%s8 + $0x14] sm:$0xf]
    %v2118 = vld [vmem:[%s8 + $0x18] sm:$0xf]
    %v2119 = vld [vmem:[%s8 + $0x1c] sm:$0xf]
    %v2120 = vld [vmem:[%s8 + $0x20] sm:$0xf]
    %v2121 = vld [vmem:[%s8 + $0x24] sm:$0xf]
    %v2122 = vld [vmem:[%s8 + $0x28] sm:$0xf]
    %v2123 = vld [vmem:[%s8 + $0x2c] sm:$0xf]
    %v2124 = vld [vmem:[%s8 + $0x30] sm:$0xf]
    %v2125 = vld [vmem:[%s8 + $0x34] sm:$0xf]
    %v2126 = vld [vmem:[%s8 + $0x38] sm:$0xf]
    %v2127 = vld [vmem:[%s8 + $0x3c] sm:$0xf]
    %v2128 = vunpack.c.l.bf16 %v2112
    %v2129 = vunpack.c.l.bf16 %v2113
    %v2130 = vunpack.c.l.bf16 %v2114
    %v2131 = vunpack.c.l.bf16 %v2115
    %v2132 = vunpack.c.l.bf16 %v2116
    %v2133 = vunpack.c.l.bf16 %v2117
    %v2134 = vunpack.c.l.bf16 %v2118
    %v2135 = vunpack.c.l.bf16 %v2119
    %v2136 = vunpack.c.l.bf16 %v2120
    %v2137 = vunpack.c.l.bf16 %v2121
    %v2138 = vunpack.c.l.bf16 %v2122
    %v2139 = vunpack.c.l.bf16 %v2123
    %v2140 = vunpack.c.l.bf16 %v2124
    %v2141 = vunpack.c.l.bf16 %v2125
    %v2142 = vunpack.c.l.bf16 %v2126
    %v2143 = vunpack.c.l.bf16 %v2127
    %v2144 = vld [vmem:[#allocation2] sm:$0xff]
    %v2145 = vld [vmem:[#allocation2 + $0x8] sm:$0xff]
    %v2146 = vld [vmem:[#allocation2 + $0x10] sm:$0xff]
    %v2147 = vld [vmem:[#allocation2 + $0x18] sm:$0xff]
    %v2148 = vld [vmem:[#allocation2 + $0x20] sm:$0xff]
    %v2149 = vld [vmem:[#allocation2 + $0x28] sm:$0xff]
    %v2150 = vld [vmem:[#allocation2 + $0x30] sm:$0xff]
    %v2151 = vld [vmem:[#allocation2 + $0x38] sm:$0xff]
    %v2152 = vld [vmem:[#allocation2 + $0x40] sm:$0xff]
    %v2153 = vld [vmem:[#allocation2 + $0x48] sm:$0xff]
    %v2154 = vld [vmem:[#allocation2 + $0x50] sm:$0xff]
    %v2155 = vld [vmem:[#allocation2 + $0x58] sm:$0xff]
    %v2156 = vld [vmem:[#allocation2 + $0x60] sm:$0xff]
    %v2157 = vld [vmem:[#allocation2 + $0x68] sm:$0xff]
    %v2158 = vld [vmem:[#allocation2 + $0x70] sm:$0xff]
    %v2159 = vld [vmem:[#allocation2 + $0x78] sm:$0xff]
    %2160 = vmatpush.msra.mxu0 %v2159
    %2161 = vmatpush.msra.mxu0 %v2158
    %2162 = vmatpush.msra.mxu0 %v2157
    %2163 = vmatpush.msra.mxu0 %v2156
    %2164 = vmatpush.msra.mxu0 %v2155
    %2165 = vmatpush.msra.mxu0 %v2154
    %2166 = vmatpush.msra.mxu0 %v2153
    %2167 = vmatpush.msra.mxu0 %v2152
    %2168 = vmatpush.msra.mxu0 %v2151
    %2169 = vmatpush.msra.mxu0 %v2150
    %2170 = vmatpush.msra.mxu0 %v2149
    %2171 = vmatpush.msra.mxu0 %v2148
    %2172 = vmatpush.msra.mxu0 %v2147
    %2173 = vmatpush.msra.mxu0 %v2146
    %2174 = vmatpush.msra.mxu0 %v2145
    %2175 = vmatpush.msra.mxu0 %v2144
    %2176 = vmatmul.f32.gmra.mxu0 %v2128
    %v2177 = vpop.f32.mrf.mxu0
    %v2178 = vadd.f32 0.0, %v2177
    %2179 = vmatmul.f32.gmra.mxu0 %v2129
    %v2180 = vpop.f32.mrf.mxu0
    %v2181 = vadd.f32 0.0, %v2180
    %2182 = vmatmul.f32.gmra.mxu0 %v2130
    %v2183 = vpop.f32.mrf.mxu0
    %v2184 = vadd.f32 0.0, %v2183
    %2185 = vmatmul.f32.gmra.mxu0 %v2131
    %v2186 = vpop.f32.mrf.mxu0
    %v2187 = vadd.f32 0.0, %v2186
    %2188 = vmatmul.f32.gmra.mxu0 %v2132
    %v2189 = vpop.f32.mrf.mxu0
    %v2190 = vadd.f32 0.0, %v2189
    %2191 = vmatmul.f32.gmra.mxu0 %v2133
    %v2192 = vpop.f32.mrf.mxu0
    %v2193 = vadd.f32 0.0, %v2192
    %2194 = vmatmul.f32.gmra.mxu0 %v2134
    %v2195 = vpop.f32.mrf.mxu0
    %v2196 = vadd.f32 0.0, %v2195
    %2197 = vmatmul.f32.gmra.mxu0 %v2135
    %v2198 = vpop.f32.mrf.mxu0
    %v2199 = vadd.f32 0.0, %v2198
    %2200 = vmatmul.f32.gmra.mxu0 %v2136
    %v2201 = vpop.f32.mrf.mxu0
    %v2202 = vadd.f32 0.0, %v2201
    %2203 = vmatmul.f32.gmra.mxu0 %v2137
    %v2204 = vpop.f32.mrf.mxu0
    %v2205 = vadd.f32 0.0, %v2204
    %2206 = vmatmul.f32.gmra.mxu0 %v2138
    %v2207 = vpop.f32.mrf.mxu0
    %v2208 = vadd.f32 0.0, %v2207
    %2209 = vmatmul.f32.gmra.mxu0 %v2139
    %v2210 = vpop.f32.mrf.mxu0
    %v2211 = vadd.f32 0.0, %v2210
    %2212 = vmatmul.f32.gmra.mxu0 %v2140
    %v2213 = vpop.f32.mrf.mxu0
    %v2214 = vadd.f32 0.0, %v2213
    %2215 = vmatmul.f32.gmra.mxu0 %v2141
    %v2216 = vpop.f32.mrf.mxu0
    %v2217 = vadd.f32 0.0, %v2216
    %2218 = vmatmul.f32.gmra.mxu0 %v2142
    %v2219 = vpop.f32.mrf.mxu0
    %v2220 = vadd.f32 0.0, %v2219
    %2221 = vmatmul.f32.gmra.mxu0 %v2143
    %v2222 = vpop.f32.mrf.mxu0
    %v2223 = vadd.f32 0.0, %v2222
    %2224 = vdwg.mxu0
    %v2225 = vmax.f32 %v2178, 1e-30
    %v2226 = vmax.f32 %v2181, 1e-30
    %v2227 = vmax.f32 %v2184, 1e-30
    %v2228 = vmax.f32 %v2187, 1e-30
    %v2229 = vmax.f32 %v2190, 1e-30
    %v2230 = vmax.f32 %v2193, 1e-30
    %v2231 = vmax.f32 %v2196, 1e-30
    %v2232 = vmax.f32 %v2199, 1e-30
    %v2233 = vmax.f32 %v2202, 1e-30
    %v2234 = vmax.f32 %v2205, 1e-30
    %v2235 = vmax.f32 %v2208, 1e-30
    %v2236 = vmax.f32 %v2211, 1e-30
    %v2237 = vmax.f32 %v2214, 1e-30
    %v2238 = vmax.f32 %v2217, 1e-30
    %v2239 = vmax.f32 %v2220, 1e-30
    %v2240 = vmax.f32 %v2223, 1e-30
    %v2241 = vlog2.pop %v2225
    %v2242 = vmul.f32 %v2241, 0.6931472
    %v2243 = vlog2.pop %v2226
    %v2244 = vmul.f32 %v2243, 0.6931472
    %v2245 = vlog2.pop %v2227
    %v2246 = vmul.f32 %v2245, 0.6931472
    %v2247 = vlog2.pop %v2228
    %v2248 = vmul.f32 %v2247, 0.6931472
    %v2249 = vlog2.pop %v2229
    %v2250 = vmul.f32 %v2249, 0.6931472
    %v2251 = vlog2.pop %v2230
    %v2252 = vmul.f32 %v2251, 0.6931472
    %v2253 = vlog2.pop %v2231
    %v2254 = vmul.f32 %v2253, 0.6931472
    %v2255 = vlog2.pop %v2232
    %v2256 = vmul.f32 %v2255, 0.6931472
    %v2257 = vlog2.pop %v2233
    %v2258 = vmul.f32 %v2257, 0.6931472
    %v2259 = vlog2.pop %v2234
    %v2260 = vmul.f32 %v2259, 0.6931472
    %v2261 = vlog2.pop %v2235
    %v2262 = vmul.f32 %v2261, 0.6931472
    %v2263 = vlog2.pop %v2236
    %v2264 = vmul.f32 %v2263, 0.6931472
    %v2265 = vlog2.pop %v2237
    %v2266 = vmul.f32 %v2265, 0.6931472
    %v2267 = vlog2.pop %v2238
    %v2268 = vmul.f32 %v2267, 0.6931472
    %v2269 = vlog2.pop %v2239
    %v2270 = vmul.f32 %v2269, 0.6931472
    %v2271 = vlog2.pop %v2240
    %v2272 = vmul.f32 %v2271, 0.6931472
    %v2273 = vld [vmem:[#allocation3] sm:$0x1]
    %v2275 = vperm.slane %v2273, 0
    %2276 = vset.pattern.permute.xlu0 0
    %2277 = vperm.xlu0 %2276, %v2275
    %v2278 = vpop.permute.xlu0 %2277
    %v2280 = vadd.f32 %v2242, %v2278
    %v2281 = vadd.f32 %v2244, %v2278
    %v2282 = vadd.f32 %v2246, %v2278
    %v2283 = vadd.f32 %v2248, %v2278
    %v2284 = vadd.f32 %v2250, %v2278
    %v2285 = vadd.f32 %v2252, %v2278
    %v2286 = vadd.f32 %v2254, %v2278
    %v2287 = vadd.f32 %v2256, %v2278
    %v2288 = vadd.f32 %v2258, %v2278
    %v2289 = vadd.f32 %v2260, %v2278
    %v2290 = vadd.f32 %v2262, %v2278
    %v2291 = vadd.f32 %v2264, %v2278
    %v2292 = vadd.f32 %v2266, %v2278
    %v2293 = vadd.f32 %v2268, %v2278
    %v2294 = vadd.f32 %v2270, %v2278
    %v2295 = vadd.f32 %v2272, %v2278
    %v2296 = vld [vmem:[#allocation5] sm:$0xff]
    %v2297 = vld [vmem:[%s9] sm:$0xff]
    %2298 = vmatpush.msra.mxu0 %v2295
    %2299 = vmatpush.msra.mxu0 %v2294
    %2300 = vmatpush.msra.mxu0 %v2293
    %2301 = vmatpush.msra.mxu0 %v2292
    %2302 = vmatpush.msra.mxu0 %v2291
    %2303 = vmatpush.msra.mxu0 %v2290
    %2304 = vmatpush.msra.mxu0 %v2289
    %2305 = vmatpush.msra.mxu0 %v2288
    %2306 = vmatpush.msra.mxu0 %v2287
    %2307 = vmatpush.msra.mxu0 %v2286
    %2308 = vmatpush.msra.mxu0 %v2285
    %2309 = vmatpush.msra.mxu0 %v2284
    %2310 = vmatpush.msra.mxu0 %v2283
    %2311 = vmatpush.msra.mxu0 %v2282
    %2312 = vmatpush.msra.mxu0 %v2281
    %2313 = vmatpush.msra.mxu0 %v2280
    %2314 = vmatmul.f32.gmra.mxu0 %v2297
    %v2315 = vpop.f32.mrf.mxu0
    %v2316 = vadd.f32 0.0, %v2315
    %2317 = vdwg.mxu0
    %v2318 = vadd.f32 %v2296, %v2316
    %vm2319 = vcmask 64512
    %2320 = vst.msk [vmem:[#allocation5] sm:$0xff] %vm2319, %v2318
    // Predicated region
    $region46: #{tpu_custom_call.1} parent=1 // pred_check
      _
    $region47: #{tpu_custom_call.1} parent=1 // pred_check_branch
      %2322 = sbr.rel (0) target = $region49
    $region48: #{tpu_custom_call.1} parent=1 // pred_region
      %2324 = vsyncadd [#allocation6], 0
      %s2326 = sshll.u32 [#allocation5], 4
      %s2327 = int_to_ptr.vmem [resolvable:$true] %s2326
      %s2328 = sshll.u32 %s10, 4
      %s2329 = int_to_ptr.hbm [resolvable:$true] %s2328
      %2331 = dma.vmem_to_hbm [thread:$0]  %s2327, 128, %s2329, [#allocation6]
    $region49: #{tpu_custom_call.1} parent=1 // pred_fallthru
      _
    // Predicated region
    $region50: #{tpu_custom_call.1} parent=1 // pred_check
      _
    $region51: #{tpu_custom_call.1} parent=1 // pred_check_branch
      %2333 = sbr.rel (0) target = $region53
    $region52: #{tpu_custom_call.1} parent=1 // pred_region
      %2335 = dma.done [#allocation6], 128
    $region53: #{tpu_custom_call.1} parent=1 // pred_fallthru
      _
    %2336 = vsyncpa [#allocation6], 1

</llo_original>
